<compile_context>
chip_gen: v6e
topology: v6e:2x2x1
jax: 0.10.0
libtpu: 0.0.40
codegen_flags: <defaults>
</compile_context>

<pallas_src>
import numpy as np
import jax
import jax.numpy as jnp
from jax import lax
from jax.experimental import pallas as pl
from jax.experimental.pallas import tpu as pltpu


def _round_up(x, m):
    return (x + m - 1) // m * m


# ----------------------------- Pallas kernel --------------------------------
def _lstm_kernel(gx_ref, whh_ref, hall_ref, h_scr, c_scr):
    """One T-chunk of the LSTM recurrence.

    gx_ref  : (Tc, Bp, 4*Dp) f32  precomputed x @ W_ih^T + bias (hoisted GEMM)
    whh_ref : (Dp, 4*Dp)     bf16 recurrent weight, gate-blocked, lane-aligned
    hall_ref: (Tc, Bp, Dp)   f32  per-step hidden states for this chunk
    h_scr, c_scr: (Bp, Dp)   f32  carry, persistent across grid steps
    """
    @pl.when(pl.program_id(0) == 0)
    def _():
        h_scr[...] = jnp.zeros_like(h_scr)
        c_scr[...] = jnp.zeros_like(c_scr)

    Tc = gx_ref.shape[0]
    Dp = h_scr.shape[1]
    whh = whh_ref[...]                        # loop-invariant load (bf16)

    def step(t, carry):
        h = h_scr[...]
        c = c_scr[...]
        # single per-step MXU op: (Bp, Dp) x (Dp, 4*Dp), bf16 in, f32 acc
        gates = gx_ref[t] + jnp.dot(h.astype(jnp.bfloat16), whh,
                                    preferred_element_type=jnp.float32)
        # Dp % 128 == 0 -> each gate slice is a free lane-aligned view
        i_g = jax.nn.sigmoid(gates[:, 0 * Dp:1 * Dp])
        f_g = jax.nn.sigmoid(gates[:, 1 * Dp:2 * Dp])
        g_g = jnp.tanh(gates[:, 2 * Dp:3 * Dp])
        o_g = jax.nn.sigmoid(gates[:, 3 * Dp:4 * Dp])
        c_new = f_g * c + i_g * g_g
        h_new = o_g * jnp.tanh(c_new)
        h_scr[...] = h_new
        c_scr[...] = c_new
        hall_ref[t] = h_new                   # lane-dense store
        return carry

    lax.fori_loop(0, Tc, step, 0, unroll=True)


def _prep_weights(w_ih, w_hh, b_ih, b_hh, Dp):
    """Re-pack torch-layout LSTM weights (4D, D), gate order (i, f, g, o),
    into lane-aligned gate blocks of width Dp (zero-padded)."""
    D = w_ih.shape[1]
    wih_g = jnp.zeros((D, 4 * Dp), jnp.float32)
    whh_g = jnp.zeros((Dp, 4 * Dp), jnp.float32)
    bias_g = jnp.zeros((4 * Dp,), jnp.float32)
    for k in range(4):
        wih_g = wih_g.at[:, k * Dp:k * Dp + D].set(w_ih[k * D:(k + 1) * D, :].T)
        whh_g = whh_g.at[:D, k * Dp:k * Dp + D].set(w_hh[k * D:(k + 1) * D, :].T)
        bias_g = bias_g.at[k * Dp:k * Dp + D].set(
            b_ih[k * D:(k + 1) * D] + b_hh[k * D:(k + 1) * D])
    return wih_g, whh_g.astype(jnp.bfloat16), bias_g


def lstm_pallas(emb_tbd, w_ih, w_hh, b_ih, b_hh, *, time_chunk=8):
    """emb_tbd: (T, B, D) f32 time-major embeddings.
    Returns (T, B, D) f32 per-step hidden states (unmasked)."""
    T, B, D = emb_tbd.shape
    Dp = _round_up(D, 128)
    Bp = _round_up(B, 8)
    Tc = time_chunk
    Tp = _round_up(T, Tc)

    wih_g, whh_g, bias_g = _prep_weights(w_ih, w_hh, b_ih, b_hh, Dp)

    # Hoisted input projection: one big (T*B, D) x (D, 4*Dp) GEMM + bias.
    gx = (jnp.dot(emb_tbd.reshape(T * B, D), wih_g,
                  precision=lax.Precision.HIGHEST)
          + bias_g[None, :]).reshape(T, B, 4 * Dp)
    gx = jnp.pad(gx, ((0, Tp - T), (0, Bp - B), (0, 0)))

    flops = 2 * Tp * Bp * Dp * 4 * Dp + 12 * Tp * Bp * Dp
    transc = 5 * Tp * Bp * Dp
    bytes_acc = Tp * Bp * 4 * Dp * 4 + Dp * 4 * Dp * 2 + Tp * Bp * Dp * 4

    h_all = pl.pallas_call(
        _lstm_kernel,
        out_shape=jax.ShapeDtypeStruct((Tp, Bp, Dp), jnp.float32),
        grid_spec=pltpu.PrefetchScalarGridSpec(
            num_scalar_prefetch=0,
            grid=(Tp // Tc,),
            in_specs=[pl.BlockSpec((Tc, Bp, 4 * Dp), lambda t: (t, 0, 0)),
                      pl.BlockSpec((Dp, 4 * Dp), lambda t: (0, 0))],
            out_specs=pl.BlockSpec((Tc, Bp, Dp), lambda t: (t, 0, 0)),
            scratch_shapes=[pltpu.VMEM((Bp, Dp), jnp.float32),
                            pltpu.VMEM((Bp, Dp), jnp.float32)]),
        compiler_params=pltpu.CompilerParams(
            dimension_semantics=("arbitrary",),      # time is sequential
            vmem_limit_bytes=32 * 1024 * 1024),      # safe on v5e/v6e/v7x
        cost_estimate=pl.CostEstimate(flops=flops, transcendentals=transc,
                                      bytes_accessed=bytes_acc),
    )(gx, whh_g)
    return h_all[:T, :B, :D]


# ------------------------------ module port ---------------------------------
class AttnEncoderPallas:
    """JAX/Pallas port of AttnEncoder (args.dim, args.bidir, args.rnn='LSTM')."""

    def __init__(self, dim, dict_size, bidir, key):
        k = jax.random.split(key, 5)
        scale = 1.0 / np.sqrt(dim)
        emb = jax.random.normal(k[0], (dict_size, dim), jnp.float32)
        self.embedding = emb.at[0].set(0.0)          # padding_idx=0
        self.w_ih = jax.random.uniform(k[1], (4 * dim, dim), jnp.float32, -scale, scale)
        self.w_hh = jax.random.uniform(k[2], (4 * dim, dim), jnp.float32, -scale, scale)
        self.b_ih = jax.random.uniform(k[3], (4 * dim,), jnp.float32, -scale, scale)
        self.b_hh = jax.random.uniform(k[4], (4 * dim,), jnp.float32, -scale, scale)
        self.dim = dim
        self.bidir = bidir

    def _rev_emb(self, emb, lengths_j, T):
        # rev[b, t] = emb[b, lengths[b]-1-t] for t < lengths[b] else 0
        idx = lengths_j[:, None] - 1 - jnp.arange(T)[None, :]        # (B, T)
        valid = idx >= 0
        idxc = jnp.clip(idx, 0, T - 1)
        rev = jnp.take_along_axis(emb, idxc[:, :, None], axis=1)
        return jnp.where(valid[:, :, None], rev, 0.0)

    def __call__(self, words, lengths, lstm_fn=lstm_pallas):
        # words: (B, T) int32 token ids (0 = pad); lengths: host int array (B,)
        B, T = words.shape
        lengths_np = np.asarray(lengths)
        lengths_j = jnp.asarray(lengths_np, jnp.int32)

        emb = self.embedding[words]                                  # (B, T, D)
        if self.bidir:
            # Batch-stack forward + reversed directions -> one LSTM call:
            # 2x matmul rows, single launch, one set of resident weights.
            emb_rev = self._rev_emb(emb, lengths_j, T)
            emb_eff = jnp.concatenate([emb, emb_rev], axis=0)        # (2B, T, D)
            len_eff = jnp.concatenate([lengths_j, lengths_j], axis=0)
        else:
            emb_eff = emb
            len_eff = lengths_j

        h_all = lstm_fn(jnp.transpose(emb_eff, (1, 0, 2)),
                        self.w_ih, self.w_hh, self.b_ih, self.b_hh)  # (T, Beff, D)
        # zero past each sequence length (reproduces torch pad_sequence padding)
        mask = jnp.arange(T)[:, None] < len_eff[None, :]
        h_all = jnp.where(mask[:, :, None], h_all, 0.0)

        max_len = int(lengths_np.max())
        last_b, last_t = B - 1, int(lengths_np[-1]) - 1

        if self.bidir:
            h_fwd, h_rev = h_all[:, :B], h_all[:, B:]
            # original concatenates without re-aligning the backward states
            b_h_all = jnp.concatenate([h_fwd, h_rev], axis=-1)[:max_len]
            out = h_rev[last_t, last_b][None, :]                     # (1, D)
        else:
            b_h_all = h_all[:max_len]
            out = h_all[last_t, last_b][None, :]                     # (1, D)
        return out, b_h_all


# ------------------------- pure-JAX reference -------------------------------
def _lstm_ref(emb_tbd, w_ih, w_hh, b_ih, b_hh):
    T, B, D = emb_tbd.shape
    wih_t, whh_t = w_ih.T, w_hh.T
    bias = (b_ih + b_hh)[None, :]

    def step(carry, x):
        h, c = carry
        gates = (jnp.dot(x, wih_t, precision=lax.Precision.HIGHEST)
                 + jnp.dot(h, whh_t, precision=lax.Precision.HIGHEST) + bias)
        i = jax.nn.sigmoid(gates[:, 0 * D:1 * D])
        f = jax.nn.sigmoid(gates[:, 1 * D:2 * D])
        g = jnp.tanh(gates[:, 2 * D:3 * D])
        o = jax.nn.sigmoid(gates[:, 3 * D:4 * D])
        c = f * c + i * g
        h = o * jnp.tanh(c)
        return (h, c), h

    init = (jnp.zeros((B, D), jnp.float32), jnp.zeros((B, D), jnp.float32))
    _, hs = lax.scan(step, init, emb_tbd)
    return hs


# ----------------------------------------------------------------------------
if __name__ == "__main__":
    dict_size, dim, B, T = 50, 32, 4, 8
    key = jax.random.PRNGKey(0)

    lengths = np.array([8, 5, 3, 6], dtype=np.int32)
    rng = np.random.RandomState(0)
    words_np = np.zeros((B, T), dtype=np.int32)
    for i in range(B):
        words_np[i, :lengths[i]] = rng.randint(1, dict_size, size=int(lengths[i]))
    words = jnp.asarray(words_np)

    for bidir in (True, False):
        enc = AttnEncoderPallas(dim, dict_size, bidir, key)

        out, b_h_all = enc(words, lengths)                 # Pallas path
        out = jax.block_until_ready(out)
        b_h_all = jax.block_until_ready(b_h_all)

        out_ref, b_h_all_ref = enc(words, lengths, lstm_fn=_lstm_ref)
        np.testing.assert_allclose(np.asarray(out), np.asarray(out_ref),
                                   rtol=2e-2, atol=2e-2)
        np.testing.assert_allclose(np.asarray(b_h_all), np.asarray(b_h_all_ref),
                                   rtol=2e-2, atol=2e-2)

        assert out.shape == (1, dim)
        assert b_h_all.shape == (int(lengths.max()), B, dim * (2 if bidir else 1))

    print("KERNEL_OK")
</pallas_src>

<mosaic_0001>
module attributes {stable_mosaic.version = 11 : i64} {
  func.func @_lstm_kernel(%arg0: i32, %arg1: memref<8x8x512xf32, #tpu.memory_space<vmem>>, %arg2: memref<128x512xbf16, #tpu.memory_space<vmem>>, %arg3: memref<8x8x128xf32, #tpu.memory_space<vmem>>, %arg4: memref<8x128xf32, #tpu.memory_space<vmem>>, %arg5: memref<8x128xf32, #tpu.memory_space<vmem>>) attributes {dimension_semantics = [#tpu.dimension_semantics<arbitrary>], iteration_bounds = array<i64: 1>, scalar_prefetch = 0 : i64, scratch_operands = 2 : i64, tpu.core_type = #tpu.core_type<tc>, window_params = [{transform_indices = @transform_0, window_bounds = array<i64: 8, 8, 512>}, {pipeline_mode = #tpu.pipeline_mode<synchronous>, transform_indices = @transform_1, window_bounds = array<i64: 128, 512>}, {transform_indices = @transform_2, window_bounds = array<i64: 8, 8, 128>}]} {
    %c0_i32 = arith.constant 0 : i32
    %0 = arith.cmpi eq, %arg0, %c0_i32 : i32
    %1 = arith.extui %0 : i1 to i32
    %c0_i32_0 = arith.constant 0 : i32
    %2 = arith.cmpi ne, %1, %c0_i32_0 : i32
    scf.if %2 {
      %cst_130 = arith.constant 0.000000e+00 : f32
      %316 = vector.broadcast %cst_130 : f32 to vector<8x128xf32>
      %c0_131 = arith.constant 0 : index
      %c0_132 = arith.constant 0 : index
      %317 = vector.load %arg4[%c0_131, %c0_132] : memref<8x128xf32, #tpu.memory_space<vmem>>, vector<8x128xf32>
      tpu.vector_store %arg4[%c0_131, %c0_132], %316 {strides = array<i32>} : memref<8x128xf32, #tpu.memory_space<vmem>>, vector<8x128xf32>,
      %cst_133 = arith.constant 0.000000e+00 : f32
      %318 = vector.broadcast %cst_133 : f32 to vector<8x128xf32>
      %c0_134 = arith.constant 0 : index
      %c0_135 = arith.constant 0 : index
      %319 = vector.load %arg5[%c0_134, %c0_135] : memref<8x128xf32, #tpu.memory_space<vmem>>, vector<8x128xf32>
      tpu.vector_store %arg5[%c0_134, %c0_135], %318 {strides = array<i32>} : memref<8x128xf32, #tpu.memory_space<vmem>>, vector<8x128xf32>,
    } else {
    }
    %c0 = arith.constant 0 : index
    %c0_1 = arith.constant 0 : index
    %3 = vector.load %arg2[%c0, %c0_1] : memref<128x512xbf16, #tpu.memory_space<vmem>>, vector<128x512xbf16>
    %c0_i32_2 = arith.constant 0 : i32
    %c0_3 = arith.constant 0 : index
    %c0_4 = arith.constant 0 : index
    %4 = vector.load %arg4[%c0_3, %c0_4] : memref<8x128xf32, #tpu.memory_space<vmem>>, vector<8x128xf32>
    %c0_5 = arith.constant 0 : index
    %c0_6 = arith.constant 0 : index
    %5 = vector.load %arg5[%c0_5, %c0_6] : memref<8x128xf32, #tpu.memory_space<vmem>>, vector<8x128xf32>
    %6 = arith.index_cast %c0_i32_2 : i32 to index
    %c0_7 = arith.constant 0 : index
    %c0_8 = arith.constant 0 : index
    %7 = vector.load %arg1[%6, %c0_7, %c0_8] : memref<8x8x512xf32, #tpu.memory_space<vmem>>, vector<1x8x512xf32>
    %8 = vector.shape_cast %7 : vector<1x8x512xf32> to vector<8x512xf32>
    %9 = arith.truncf %4 : vector<8x128xf32> to vector<8x128xbf16>
    %cst = arith.constant dense<0.000000e+00> : vector<8x512xf32>
    %10 = tpu.matmul %9, %3, %cst {dimension_numbers = #tpu.dot_dimension_numbers<[1], [0], [0], [1], [0, 0, 1, 1], [], []>} : vector<8x128xbf16>, vector<128x512xbf16>, vector<8x512xf32> -> vector<8x512xf32>
    %11 = arith.addf %8, %10 : vector<8x512xf32>
    %12 = vector.extract_strided_slice %11 {offsets = [0, 0], sizes = [8, 128], strides = [1, 1]} : vector<8x512xf32> to vector<8x128xf32>
    %13 = arith.negf %12 : vector<8x128xf32>
    %14 = math.exp %13 : vector<8x128xf32>
    %cst_9 = arith.constant 1.000000e+00 : f32
    %15 = vector.broadcast %cst_9 : f32 to vector<8x128xf32>
    %16 = arith.addf %15, %14 : vector<8x128xf32>
    %17 = arith.divf %15, %16 : vector<8x128xf32>
    %18 = vector.extract_strided_slice %11 {offsets = [0, 128], sizes = [8, 128], strides = [1, 1]} : vector<8x512xf32> to vector<8x128xf32>
    %19 = arith.negf %18 : vector<8x128xf32>
    %20 = math.exp %19 : vector<8x128xf32>
    %cst_10 = arith.constant 1.000000e+00 : f32
    %21 = vector.broadcast %cst_10 : f32 to vector<8x128xf32>
    %22 = arith.addf %21, %20 : vector<8x128xf32>
    %23 = arith.divf %21, %22 : vector<8x128xf32>
    %24 = vector.extract_strided_slice %11 {offsets = [0, 256], sizes = [8, 128], strides = [1, 1]} : vector<8x512xf32> to vector<8x128xf32>
    %25 = math.tanh %24 : vector<8x128xf32>
    %26 = vector.extract_strided_slice %11 {offsets = [0, 384], sizes = [8, 128], strides = [1, 1]} : vector<8x512xf32> to vector<8x128xf32>
    %27 = arith.negf %26 : vector<8x128xf32>
    %28 = math.exp %27 : vector<8x128xf32>
    %cst_11 = arith.constant 1.000000e+00 : f32
    %29 = vector.broadcast %cst_11 : f32 to vector<8x128xf32>
    %30 = arith.addf %29, %28 : vector<8x128xf32>
    %31 = arith.divf %29, %30 : vector<8x128xf32>
    %32 = arith.mulf %23, %5 : vector<8x128xf32>
    %33 = arith.mulf %17, %25 : vector<8x128xf32>
    %34 = arith.addf %32, %33 : vector<8x128xf32>
    %35 = math.tanh %34 : vector<8x128xf32>
    %36 = arith.mulf %31, %35 : vector<8x128xf32>
    %c0_12 = arith.constant 0 : index
    %c0_13 = arith.constant 0 : index
    %37 = vector.load %arg4[%c0_12, %c0_13] : memref<8x128xf32, #tpu.memory_space<vmem>>, vector<8x128xf32>
    tpu.vector_store %arg4[%c0_12, %c0_13], %36 {strides = array<i32>} : memref<8x128xf32, #tpu.memory_space<vmem>>, vector<8x128xf32>,
    %c0_14 = arith.constant 0 : index
    %c0_15 = arith.constant 0 : index
    %38 = vector.load %arg5[%c0_14, %c0_15] : memref<8x128xf32, #tpu.memory_space<vmem>>, vector<8x128xf32>
    tpu.vector_store %arg5[%c0_14, %c0_15], %34 {strides = array<i32>} : memref<8x128xf32, #tpu.memory_space<vmem>>, vector<8x128xf32>,
    %39 = arith.index_cast %c0_i32_2 : i32 to index
    %c0_16 = arith.constant 0 : index
    %c0_17 = arith.constant 0 : index
    %40 = vector.load %arg3[%39, %c0_16, %c0_17] : memref<8x8x128xf32, #tpu.memory_space<vmem>>, vector<1x8x128xf32>
    %41 = vector.shape_cast %40 : vector<1x8x128xf32> to vector<8x128xf32>
    %42 = vector.shape_cast %36 : vector<8x128xf32> to vector<1x8x128xf32>
    tpu.vector_store %arg3[%39, %c0_16, %c0_17], %42 {strides = array<i32>} : memref<8x8x128xf32, #tpu.memory_space<vmem>>, vector<1x8x128xf32>,
    %c1_i32 = arith.constant 1 : i32
    %c0_18 = arith.constant 0 : index
    %c0_19 = arith.constant 0 : index
    %43 = vector.load %arg4[%c0_18, %c0_19] : memref<8x128xf32, #tpu.memory_space<vmem>>, vector<8x128xf32>
    %c0_20 = arith.constant 0 : index
    %c0_21 = arith.constant 0 : index
    %44 = vector.load %arg5[%c0_20, %c0_21] : memref<8x128xf32, #tpu.memory_space<vmem>>, vector<8x128xf32>
    %45 = arith.index_cast %c1_i32 : i32 to index
    %c0_22 = arith.constant 0 : index
    %c0_23 = arith.constant 0 : index
    %46 = vector.load %arg1[%45, %c0_22, %c0_23] : memref<8x8x512xf32, #tpu.memory_space<vmem>>, vector<1x8x512xf32>
    %47 = vector.shape_cast %46 : vector<1x8x512xf32> to vector<8x512xf32>
    %48 = arith.truncf %43 : vector<8x128xf32> to vector<8x128xbf16>
    %cst_24 = arith.constant dense<0.000000e+00> : vector<8x512xf32>
    %49 = tpu.matmul %48, %3, %cst_24 {dimension_numbers = #tpu.dot_dimension_numbers<[1], [0], [0], [1], [0, 0, 1, 1], [], []>} : vector<8x128xbf16>, vector<128x512xbf16>, vector<8x512xf32> -> vector<8x512xf32>
    %50 = arith.addf %47, %49 : vector<8x512xf32>
    %51 = vector.extract_strided_slice %50 {offsets = [0, 0], sizes = [8, 128], strides = [1, 1]} : vector<8x512xf32> to vector<8x128xf32>
    %52 = arith.negf %51 : vector<8x128xf32>
    %53 = math.exp %52 : vector<8x128xf32>
    %cst_25 = arith.constant 1.000000e+00 : f32
    %54 = vector.broadcast %cst_25 : f32 to vector<8x128xf32>
    %55 = arith.addf %54, %53 : vector<8x128xf32>
    %56 = arith.divf %54, %55 : vector<8x128xf32>
    %57 = vector.extract_strided_slice %50 {offsets = [0, 128], sizes = [8, 128], strides = [1, 1]} : vector<8x512xf32> to vector<8x128xf32>
    %58 = arith.negf %57 : vector<8x128xf32>
    %59 = math.exp %58 : vector<8x128xf32>
    %cst_26 = arith.constant 1.000000e+00 : f32
    %60 = vector.broadcast %cst_26 : f32 to vector<8x128xf32>
    %61 = arith.addf %60, %59 : vector<8x128xf32>
    %62 = arith.divf %60, %61 : vector<8x128xf32>
    %63 = vector.extract_strided_slice %50 {offsets = [0, 256], sizes = [8, 128], strides = [1, 1]} : vector<8x512xf32> to vector<8x128xf32>
    %64 = math.tanh %63 : vector<8x128xf32>
    %65 = vector.extract_strided_slice %50 {offsets = [0, 384], sizes = [8, 128], strides = [1, 1]} : vector<8x512xf32> to vector<8x128xf32>
    %66 = arith.negf %65 : vector<8x128xf32>
    %67 = math.exp %66 : vector<8x128xf32>
    %cst_27 = arith.constant 1.000000e+00 : f32
    %68 = vector.broadcast %cst_27 : f32 to vector<8x128xf32>
    %69 = arith.addf %68, %67 : vector<8x128xf32>
    %70 = arith.divf %68, %69 : vector<8x128xf32>
    %71 = arith.mulf %62, %44 : vector<8x128xf32>
    %72 = arith.mulf %56, %64 : vector<8x128xf32>
    %73 = arith.addf %71, %72 : vector<8x128xf32>
    %74 = math.tanh %73 : vector<8x128xf32>
    %75 = arith.mulf %70, %74 : vector<8x128xf32>
    %c0_28 = arith.constant 0 : index
    %c0_29 = arith.constant 0 : index
    %76 = vector.load %arg4[%c0_28, %c0_29] : memref<8x128xf32, #tpu.memory_space<vmem>>, vector<8x128xf32>
    tpu.vector_store %arg4[%c0_28, %c0_29], %75 {strides = array<i32>} : memref<8x128xf32, #tpu.memory_space<vmem>>, vector<8x128xf32>,
    %c0_30 = arith.constant 0 : index
    %c0_31 = arith.constant 0 : index
    %77 = vector.load %arg5[%c0_30, %c0_31] : memref<8x128xf32, #tpu.memory_space<vmem>>, vector<8x128xf32>
    tpu.vector_store %arg5[%c0_30, %c0_31], %73 {strides = array<i32>} : memref<8x128xf32, #tpu.memory_space<vmem>>, vector<8x128xf32>,
    %78 = arith.index_cast %c1_i32 : i32 to index
    %c0_32 = arith.constant 0 : index
    %c0_33 = arith.constant 0 : index
    %79 = vector.load %arg3[%78, %c0_32, %c0_33] : memref<8x8x128xf32, #tpu.memory_space<vmem>>, vector<1x8x128xf32>
    %80 = vector.shape_cast %79 : vector<1x8x128xf32> to vector<8x128xf32>
    %81 = vector.shape_cast %75 : vector<8x128xf32> to vector<1x8x128xf32>
    tpu.vector_store %arg3[%78, %c0_32, %c0_33], %81 {strides = array<i32>} : memref<8x8x128xf32, #tpu.memory_space<vmem>>, vector<1x8x128xf32>,
    %c2_i32 = arith.constant 2 : i32
    %c0_34 = arith.constant 0 : index
    %c0_35 = arith.constant 0 : index
    %82 = vector.load %arg4[%c0_34, %c0_35] : memref<8x128xf32, #tpu.memory_space<vmem>>, vector<8x128xf32>
    %c0_36 = arith.constant 0 : index
    %c0_37 = arith.constant 0 : index
    %83 = vector.load %arg5[%c0_36, %c0_37] : memref<8x128xf32, #tpu.memory_space<vmem>>, vector<8x128xf32>
    %84 = arith.index_cast %c2_i32 : i32 to index
    %c0_38 = arith.constant 0 : index
    %c0_39 = arith.constant 0 : index
    %85 = vector.load %arg1[%84, %c0_38, %c0_39] : memref<8x8x512xf32, #tpu.memory_space<vmem>>, vector<1x8x512xf32>
    %86 = vector.shape_cast %85 : vector<1x8x512xf32> to vector<8x512xf32>
    %87 = arith.truncf %82 : vector<8x128xf32> to vector<8x128xbf16>
    %cst_40 = arith.constant dense<0.000000e+00> : vector<8x512xf32>
    %88 = tpu.matmul %87, %3, %cst_40 {dimension_numbers = #tpu.dot_dimension_numbers<[1], [0], [0], [1], [0, 0, 1, 1], [], []>} : vector<8x128xbf16>, vector<128x512xbf16>, vector<8x512xf32> -> vector<8x512xf32>
    %89 = arith.addf %86, %88 : vector<8x512xf32>
    %90 = vector.extract_strided_slice %89 {offsets = [0, 0], sizes = [8, 128], strides = [1, 1]} : vector<8x512xf32> to vector<8x128xf32>
    %91 = arith.negf %90 : vector<8x128xf32>
    %92 = math.exp %91 : vector<8x128xf32>
    %cst_41 = arith.constant 1.000000e+00 : f32
    %93 = vector.broadcast %cst_41 : f32 to vector<8x128xf32>
    %94 = arith.addf %93, %92 : vector<8x128xf32>
    %95 = arith.divf %93, %94 : vector<8x128xf32>
    %96 = vector.extract_strided_slice %89 {offsets = [0, 128], sizes = [8, 128], strides = [1, 1]} : vector<8x512xf32> to vector<8x128xf32>
    %97 = arith.negf %96 : vector<8x128xf32>
    %98 = math.exp %97 : vector<8x128xf32>
    %cst_42 = arith.constant 1.000000e+00 : f32
    %99 = vector.broadcast %cst_42 : f32 to vector<8x128xf32>
    %100 = arith.addf %99, %98 : vector<8x128xf32>
    %101 = arith.divf %99, %100 : vector<8x128xf32>
    %102 = vector.extract_strided_slice %89 {offsets = [0, 256], sizes = [8, 128], strides = [1, 1]} : vector<8x512xf32> to vector<8x128xf32>
    %103 = math.tanh %102 : vector<8x128xf32>
    %104 = vector.extract_strided_slice %89 {offsets = [0, 384], sizes = [8, 128], strides = [1, 1]} : vector<8x512xf32> to vector<8x128xf32>
    %105 = arith.negf %104 : vector<8x128xf32>
    %106 = math.exp %105 : vector<8x128xf32>
    %cst_43 = arith.constant 1.000000e+00 : f32
    %107 = vector.broadcast %cst_43 : f32 to vector<8x128xf32>
    %108 = arith.addf %107, %106 : vector<8x128xf32>
    %109 = arith.divf %107, %108 : vector<8x128xf32>
    %110 = arith.mulf %101, %83 : vector<8x128xf32>
    %111 = arith.mulf %95, %103 : vector<8x128xf32>
    %112 = arith.addf %110, %111 : vector<8x128xf32>
    %113 = math.tanh %112 : vector<8x128xf32>
    %114 = arith.mulf %109, %113 : vector<8x128xf32>
    %c0_44 = arith.constant 0 : index
    %c0_45 = arith.constant 0 : index
    %115 = vector.load %arg4[%c0_44, %c0_45] : memref<8x128xf32, #tpu.memory_space<vmem>>, vector<8x128xf32>
    tpu.vector_store %arg4[%c0_44, %c0_45], %114 {strides = array<i32>} : memref<8x128xf32, #tpu.memory_space<vmem>>, vector<8x128xf32>,
    %c0_46 = arith.constant 0 : index
    %c0_47 = arith.constant 0 : index
    %116 = vector.load %arg5[%c0_46, %c0_47] : memref<8x128xf32, #tpu.memory_space<vmem>>, vector<8x128xf32>
    tpu.vector_store %arg5[%c0_46, %c0_47], %112 {strides = array<i32>} : memref<8x128xf32, #tpu.memory_space<vmem>>, vector<8x128xf32>,
    %117 = arith.index_cast %c2_i32 : i32 to index
    %c0_48 = arith.constant 0 : index
    %c0_49 = arith.constant 0 : index
    %118 = vector.load %arg3[%117, %c0_48, %c0_49] : memref<8x8x128xf32, #tpu.memory_space<vmem>>, vector<1x8x128xf32>
    %119 = vector.shape_cast %118 : vector<1x8x128xf32> to vector<8x128xf32>
    %120 = vector.shape_cast %114 : vector<8x128xf32> to vector<1x8x128xf32>
    tpu.vector_store %arg3[%117, %c0_48, %c0_49], %120 {strides = array<i32>} : memref<8x8x128xf32, #tpu.memory_space<vmem>>, vector<1x8x128xf32>,
    %c3_i32 = arith.constant 3 : i32
    %c0_50 = arith.constant 0 : index
    %c0_51 = arith.constant 0 : index
    %121 = vector.load %arg4[%c0_50, %c0_51] : memref<8x128xf32, #tpu.memory_space<vmem>>, vector<8x128xf32>
    %c0_52 = arith.constant 0 : index
    %c0_53 = arith.constant 0 : index
    %122 = vector.load %arg5[%c0_52, %c0_53] : memref<8x128xf32, #tpu.memory_space<vmem>>, vector<8x128xf32>
    %123 = arith.index_cast %c3_i32 : i32 to index
    %c0_54 = arith.constant 0 : index
    %c0_55 = arith.constant 0 : index
    %124 = vector.load %arg1[%123, %c0_54, %c0_55] : memref<8x8x512xf32, #tpu.memory_space<vmem>>, vector<1x8x512xf32>
    %125 = vector.shape_cast %124 : vector<1x8x512xf32> to vector<8x512xf32>
    %126 = arith.truncf %121 : vector<8x128xf32> to vector<8x128xbf16>
    %cst_56 = arith.constant dense<0.000000e+00> : vector<8x512xf32>
    %127 = tpu.matmul %126, %3, %cst_56 {dimension_numbers = #tpu.dot_dimension_numbers<[1], [0], [0], [1], [0, 0, 1, 1], [], []>} : vector<8x128xbf16>, vector<128x512xbf16>, vector<8x512xf32> -> vector<8x512xf32>
    %128 = arith.addf %125, %127 : vector<8x512xf32>
    %129 = vector.extract_strided_slice %128 {offsets = [0, 0], sizes = [8, 128], strides = [1, 1]} : vector<8x512xf32> to vector<8x128xf32>
    %130 = arith.negf %129 : vector<8x128xf32>
    %131 = math.exp %130 : vector<8x128xf32>
    %cst_57 = arith.constant 1.000000e+00 : f32
    %132 = vector.broadcast %cst_57 : f32 to vector<8x128xf32>
    %133 = arith.addf %132, %131 : vector<8x128xf32>
    %134 = arith.divf %132, %133 : vector<8x128xf32>
    %135 = vector.extract_strided_slice %128 {offsets = [0, 128], sizes = [8, 128], strides = [1, 1]} : vector<8x512xf32> to vector<8x128xf32>
    %136 = arith.negf %135 : vector<8x128xf32>
    %137 = math.exp %136 : vector<8x128xf32>
    %cst_58 = arith.constant 1.000000e+00 : f32
    %138 = vector.broadcast %cst_58 : f32 to vector<8x128xf32>
    %139 = arith.addf %138, %137 : vector<8x128xf32>
    %140 = arith.divf %138, %139 : vector<8x128xf32>
    %141 = vector.extract_strided_slice %128 {offsets = [0, 256], sizes = [8, 128], strides = [1, 1]} : vector<8x512xf32> to vector<8x128xf32>
    %142 = math.tanh %141 : vector<8x128xf32>
    %143 = vector.extract_strided_slice %128 {offsets = [0, 384], sizes = [8, 128], strides = [1, 1]} : vector<8x512xf32> to vector<8x128xf32>
    %144 = arith.negf %143 : vector<8x128xf32>
    %145 = math.exp %144 : vector<8x128xf32>
    %cst_59 = arith.constant 1.000000e+00 : f32
    %146 = vector.broadcast %cst_59 : f32 to vector<8x128xf32>
    %147 = arith.addf %146, %145 : vector<8x128xf32>
    %148 = arith.divf %146, %147 : vector<8x128xf32>
    %149 = arith.mulf %140, %122 : vector<8x128xf32>
    %150 = arith.mulf %134, %142 : vector<8x128xf32>
    %151 = arith.addf %149, %150 : vector<8x128xf32>
    %152 = math.tanh %151 : vector<8x128xf32>
    %153 = arith.mulf %148, %152 : vector<8x128xf32>
    %c0_60 = arith.constant 0 : index
    %c0_61 = arith.constant 0 : index
    %154 = vector.load %arg4[%c0_60, %c0_61] : memref<8x128xf32, #tpu.memory_space<vmem>>, vector<8x128xf32>
    tpu.vector_store %arg4[%c0_60, %c0_61], %153 {strides = array<i32>} : memref<8x128xf32, #tpu.memory_space<vmem>>, vector<8x128xf32>,
    %c0_62 = arith.constant 0 : index
    %c0_63 = arith.constant 0 : index
    %155 = vector.load %arg5[%c0_62, %c0_63] : memref<8x128xf32, #tpu.memory_space<vmem>>, vector<8x128xf32>
    tpu.vector_store %arg5[%c0_62, %c0_63], %151 {strides = array<i32>} : memref<8x128xf32, #tpu.memory_space<vmem>>, vector<8x128xf32>,
    %156 = arith.index_cast %c3_i32 : i32 to index
    %c0_64 = arith.constant 0 : index
    %c0_65 = arith.constant 0 : index
    %157 = vector.load %arg3[%156, %c0_64, %c0_65] : memref<8x8x128xf32, #tpu.memory_space<vmem>>, vector<1x8x128xf32>
    %158 = vector.shape_cast %157 : vector<1x8x128xf32> to vector<8x128xf32>
    %159 = vector.shape_cast %153 : vector<8x128xf32> to vector<1x8x128xf32>
    tpu.vector_store %arg3[%156, %c0_64, %c0_65], %159 {strides = array<i32>} : memref<8x8x128xf32, #tpu.memory_space<vmem>>, vector<1x8x128xf32>,
    %c4_i32 = arith.constant 4 : i32
    %c0_66 = arith.constant 0 : index
    %c0_67 = arith.constant 0 : index
    %160 = vector.load %arg4[%c0_66, %c0_67] : memref<8x128xf32, #tpu.memory_space<vmem>>, vector<8x128xf32>
    %c0_68 = arith.constant 0 : index
    %c0_69 = arith.constant 0 : index
    %161 = vector.load %arg5[%c0_68, %c0_69] : memref<8x128xf32, #tpu.memory_space<vmem>>, vector<8x128xf32>
    %162 = arith.index_cast %c4_i32 : i32 to index
    %c0_70 = arith.constant 0 : index
    %c0_71 = arith.constant 0 : index
    %163 = vector.load %arg1[%162, %c0_70, %c0_71] : memref<8x8x512xf32, #tpu.memory_space<vmem>>, vector<1x8x512xf32>
    %164 = vector.shape_cast %163 : vector<1x8x512xf32> to vector<8x512xf32>
    %165 = arith.truncf %160 : vector<8x128xf32> to vector<8x128xbf16>
    %cst_72 = arith.constant dense<0.000000e+00> : vector<8x512xf32>
    %166 = tpu.matmul %165, %3, %cst_72 {dimension_numbers = #tpu.dot_dimension_numbers<[1], [0], [0], [1], [0, 0, 1, 1], [], []>} : vector<8x128xbf16>, vector<128x512xbf16>, vector<8x512xf32> -> vector<8x512xf32>
    %167 = arith.addf %164, %166 : vector<8x512xf32>
    %168 = vector.extract_strided_slice %167 {offsets = [0, 0], sizes = [8, 128], strides = [1, 1]} : vector<8x512xf32> to vector<8x128xf32>
    %169 = arith.negf %168 : vector<8x128xf32>
    %170 = math.exp %169 : vector<8x128xf32>
    %cst_73 = arith.constant 1.000000e+00 : f32
    %171 = vector.broadcast %cst_73 : f32 to vector<8x128xf32>
    %172 = arith.addf %171, %170 : vector<8x128xf32>
    %173 = arith.divf %171, %172 : vector<8x128xf32>
    %174 = vector.extract_strided_slice %167 {offsets = [0, 128], sizes = [8, 128], strides = [1, 1]} : vector<8x512xf32> to vector<8x128xf32>
    %175 = arith.negf %174 : vector<8x128xf32>
    %176 = math.exp %175 : vector<8x128xf32>
    %cst_74 = arith.constant 1.000000e+00 : f32
    %177 = vector.broadcast %cst_74 : f32 to vector<8x128xf32>
    %178 = arith.addf %177, %176 : vector<8x128xf32>
    %179 = arith.divf %177, %178 : vector<8x128xf32>
    %180 = vector.extract_strided_slice %167 {offsets = [0, 256], sizes = [8, 128], strides = [1, 1]} : vector<8x512xf32> to vector<8x128xf32>
    %181 = math.tanh %180 : vector<8x128xf32>
    %182 = vector.extract_strided_slice %167 {offsets = [0, 384], sizes = [8, 128], strides = [1, 1]} : vector<8x512xf32> to vector<8x128xf32>
    %183 = arith.negf %182 : vector<8x128xf32>
    %184 = math.exp %183 : vector<8x128xf32>
    %cst_75 = arith.constant 1.000000e+00 : f32
    %185 = vector.broadcast %cst_75 : f32 to vector<8x128xf32>
    %186 = arith.addf %185, %184 : vector<8x128xf32>
    %187 = arith.divf %185, %186 : vector<8x128xf32>
    %188 = arith.mulf %179, %161 : vector<8x128xf32>
    %189 = arith.mulf %173, %181 : vector<8x128xf32>
    %190 = arith.addf %188, %189 : vector<8x128xf32>
    %191 = math.tanh %190 : vector<8x128xf32>
    %192 = arith.mulf %187, %191 : vector<8x128xf32>
    %c0_76 = arith.constant 0 : index
    %c0_77 = arith.constant 0 : index
    %193 = vector.load %arg4[%c0_76, %c0_77] : memref<8x128xf32, #tpu.memory_space<vmem>>, vector<8x128xf32>
    tpu.vector_store %arg4[%c0_76, %c0_77], %192 {strides = array<i32>} : memref<8x128xf32, #tpu.memory_space<vmem>>, vector<8x128xf32>,
    %c0_78 = arith.constant 0 : index
    %c0_79 = arith.constant 0 : index
    %194 = vector.load %arg5[%c0_78, %c0_79] : memref<8x128xf32, #tpu.memory_space<vmem>>, vector<8x128xf32>
    tpu.vector_store %arg5[%c0_78, %c0_79], %190 {strides = array<i32>} : memref<8x128xf32, #tpu.memory_space<vmem>>, vector<8x128xf32>,
    %195 = arith.index_cast %c4_i32 : i32 to index
    %c0_80 = arith.constant 0 : index
    %c0_81 = arith.constant 0 : index
    %196 = vector.load %arg3[%195, %c0_80, %c0_81] : memref<8x8x128xf32, #tpu.memory_space<vmem>>, vector<1x8x128xf32>
    %197 = vector.shape_cast %196 : vector<1x8x128xf32> to vector<8x128xf32>
    %198 = vector.shape_cast %192 : vector<8x128xf32> to vector<1x8x128xf32>
    tpu.vector_store %arg3[%195, %c0_80, %c0_81], %198 {strides = array<i32>} : memref<8x8x128xf32, #tpu.memory_space<vmem>>, vector<1x8x128xf32>,
    %c5_i32 = arith.constant 5 : i32
    %c0_82 = arith.constant 0 : index
    %c0_83 = arith.constant 0 : index
    %199 = vector.load %arg4[%c0_82, %c0_83] : memref<8x128xf32, #tpu.memory_space<vmem>>, vector<8x128xf32>
    %c0_84 = arith.constant 0 : index
    %c0_85 = arith.constant 0 : index
    %200 = vector.load %arg5[%c0_84, %c0_85] : memref<8x128xf32, #tpu.memory_space<vmem>>, vector<8x128xf32>
    %201 = arith.index_cast %c5_i32 : i32 to index
    %c0_86 = arith.constant 0 : index
    %c0_87 = arith.constant 0 : index
    %202 = vector.load %arg1[%201, %c0_86, %c0_87] : memref<8x8x512xf32, #tpu.memory_space<vmem>>, vector<1x8x512xf32>
    %203 = vector.shape_cast %202 : vector<1x8x512xf32> to vector<8x512xf32>
    %204 = arith.truncf %199 : vector<8x128xf32> to vector<8x128xbf16>
    %cst_88 = arith.constant dense<0.000000e+00> : vector<8x512xf32>
    %205 = tpu.matmul %204, %3, %cst_88 {dimension_numbers = #tpu.dot_dimension_numbers<[1], [0], [0], [1], [0, 0, 1, 1], [], []>} : vector<8x128xbf16>, vector<128x512xbf16>, vector<8x512xf32> -> vector<8x512xf32>
    %206 = arith.addf %203, %205 : vector<8x512xf32>
    %207 = vector.extract_strided_slice %206 {offsets = [0, 0], sizes = [8, 128], strides = [1, 1]} : vector<8x512xf32> to vector<8x128xf32>
    %208 = arith.negf %207 : vector<8x128xf32>
    %209 = math.exp %208 : vector<8x128xf32>
    %cst_89 = arith.constant 1.000000e+00 : f32
    %210 = vector.broadcast %cst_89 : f32 to vector<8x128xf32>
    %211 = arith.addf %210, %209 : vector<8x128xf32>
    %212 = arith.divf %210, %211 : vector<8x128xf32>
    %213 = vector.extract_strided_slice %206 {offsets = [0, 128], sizes = [8, 128], strides = [1, 1]} : vector<8x512xf32> to vector<8x128xf32>
    %214 = arith.negf %213 : vector<8x128xf32>
    %215 = math.exp %214 : vector<8x128xf32>
    %cst_90 = arith.constant 1.000000e+00 : f32
    %216 = vector.broadcast %cst_90 : f32 to vector<8x128xf32>
    %217 = arith.addf %216, %215 : vector<8x128xf32>
    %218 = arith.divf %216, %217 : vector<8x128xf32>
    %219 = vector.extract_strided_slice %206 {offsets = [0, 256], sizes = [8, 128], strides = [1, 1]} : vector<8x512xf32> to vector<8x128xf32>
    %220 = math.tanh %219 : vector<8x128xf32>
    %221 = vector.extract_strided_slice %206 {offsets = [0, 384], sizes = [8, 128], strides = [1, 1]} : vector<8x512xf32> to vector<8x128xf32>
    %222 = arith.negf %221 : vector<8x128xf32>
    %223 = math.exp %222 : vector<8x128xf32>
    %cst_91 = arith.constant 1.000000e+00 : f32
    %224 = vector.broadcast %cst_91 : f32 to vector<8x128xf32>
    %225 = arith.addf %224, %223 : vector<8x128xf32>
    %226 = arith.divf %224, %225 : vector<8x128xf32>
    %227 = arith.mulf %218, %200 : vector<8x128xf32>
    %228 = arith.mulf %212, %220 : vector<8x128xf32>
    %229 = arith.addf %227, %228 : vector<8x128xf32>
    %230 = math.tanh %229 : vector<8x128xf32>
    %231 = arith.mulf %226, %230 : vector<8x128xf32>
    %c0_92 = arith.constant 0 : index
    %c0_93 = arith.constant 0 : index
    %232 = vector.load %arg4[%c0_92, %c0_93] : memref<8x128xf32, #tpu.memory_space<vmem>>, vector<8x128xf32>
    tpu.vector_store %arg4[%c0_92, %c0_93], %231 {strides = array<i32>} : memref<8x128xf32, #tpu.memory_space<vmem>>, vector<8x128xf32>,
    %c0_94 = arith.constant 0 : index
    %c0_95 = arith.constant 0 : index
    %233 = vector.load %arg5[%c0_94, %c0_95] : memref<8x128xf32, #tpu.memory_space<vmem>>, vector<8x128xf32>
    tpu.vector_store %arg5[%c0_94, %c0_95], %229 {strides = array<i32>} : memref<8x128xf32, #tpu.memory_space<vmem>>, vector<8x128xf32>,
    %234 = arith.index_cast %c5_i32 : i32 to index
    %c0_96 = arith.constant 0 : index
    %c0_97 = arith.constant 0 : index
    %235 = vector.load %arg3[%234, %c0_96, %c0_97] : memref<8x8x128xf32, #tpu.memory_space<vmem>>, vector<1x8x128xf32>
    %236 = vector.shape_cast %235 : vector<1x8x128xf32> to vector<8x128xf32>
    %237 = vector.shape_cast %231 : vector<8x128xf32> to vector<1x8x128xf32>
    tpu.vector_store %arg3[%234, %c0_96, %c0_97], %237 {strides = array<i32>} : memref<8x8x128xf32, #tpu.memory_space<vmem>>, vector<1x8x128xf32>,
    %c6_i32 = arith.constant 6 : i32
    %c0_98 = arith.constant 0 : index
    %c0_99 = arith.constant 0 : index
    %238 = vector.load %arg4[%c0_98, %c0_99] : memref<8x128xf32, #tpu.memory_space<vmem>>, vector<8x128xf32>
    %c0_100 = arith.constant 0 : index
    %c0_101 = arith.constant 0 : index
    %239 = vector.load %arg5[%c0_100, %c0_101] : memref<8x128xf32, #tpu.memory_space<vmem>>, vector<8x128xf32>
    %240 = arith.index_cast %c6_i32 : i32 to index
    %c0_102 = arith.constant 0 : index
    %c0_103 = arith.constant 0 : index
    %241 = vector.load %arg1[%240, %c0_102, %c0_103] : memref<8x8x512xf32, #tpu.memory_space<vmem>>, vector<1x8x512xf32>
    %242 = vector.shape_cast %241 : vector<1x8x512xf32> to vector<8x512xf32>
    %243 = arith.truncf %238 : vector<8x128xf32> to vector<8x128xbf16>
    %cst_104 = arith.constant dense<0.000000e+00> : vector<8x512xf32>
    %244 = tpu.matmul %243, %3, %cst_104 {dimension_numbers = #tpu.dot_dimension_numbers<[1], [0], [0], [1], [0, 0, 1, 1], [], []>} : vector<8x128xbf16>, vector<128x512xbf16>, vector<8x512xf32> -> vector<8x512xf32>
    %245 = arith.addf %242, %244 : vector<8x512xf32>
    %246 = vector.extract_strided_slice %245 {offsets = [0, 0], sizes = [8, 128], strides = [1, 1]} : vector<8x512xf32> to vector<8x128xf32>
    %247 = arith.negf %246 : vector<8x128xf32>
    %248 = math.exp %247 : vector<8x128xf32>
    %cst_105 = arith.constant 1.000000e+00 : f32
    %249 = vector.broadcast %cst_105 : f32 to vector<8x128xf32>
    %250 = arith.addf %249, %248 : vector<8x128xf32>
    %251 = arith.divf %249, %250 : vector<8x128xf32>
    %252 = vector.extract_strided_slice %245 {offsets = [0, 128], sizes = [8, 128], strides = [1, 1]} : vector<8x512xf32> to vector<8x128xf32>
    %253 = arith.negf %252 : vector<8x128xf32>
    %254 = math.exp %253 : vector<8x128xf32>
    %cst_106 = arith.constant 1.000000e+00 : f32
    %255 = vector.broadcast %cst_106 : f32 to vector<8x128xf32>
    %256 = arith.addf %255, %254 : vector<8x128xf32>
    %257 = arith.divf %255, %256 : vector<8x128xf32>
    %258 = vector.extract_strided_slice %245 {offsets = [0, 256], sizes = [8, 128], strides = [1, 1]} : vector<8x512xf32> to vector<8x128xf32>
    %259 = math.tanh %258 : vector<8x128xf32>
    %260 = vector.extract_strided_slice %245 {offsets = [0, 384], sizes = [8, 128], strides = [1, 1]} : vector<8x512xf32> to vector<8x128xf32>
    %261 = arith.negf %260 : vector<8x128xf32>
    %262 = math.exp %261 : vector<8x128xf32>
    %cst_107 = arith.constant 1.000000e+00 : f32
    %263 = vector.broadcast %cst_107 : f32 to vector<8x128xf32>
    %264 = arith.addf %263, %262 : vector<8x128xf32>
    %265 = arith.divf %263, %264 : vector<8x128xf32>
    %266 = arith.mulf %257, %239 : vector<8x128xf32>
    %267 = arith.mulf %251, %259 : vector<8x128xf32>
    %268 = arith.addf %266, %267 : vector<8x128xf32>
    %269 = math.tanh %268 : vector<8x128xf32>
    %270 = arith.mulf %265, %269 : vector<8x128xf32>
    %c0_108 = arith.constant 0 : index
    %c0_109 = arith.constant 0 : index
    %271 = vector.load %arg4[%c0_108, %c0_109] : memref<8x128xf32, #tpu.memory_space<vmem>>, vector<8x128xf32>
    tpu.vector_store %arg4[%c0_108, %c0_109], %270 {strides = array<i32>} : memref<8x128xf32, #tpu.memory_space<vmem>>, vector<8x128xf32>,
    %c0_110 = arith.constant 0 : index
    %c0_111 = arith.constant 0 : index
    %272 = vector.load %arg5[%c0_110, %c0_111] : memref<8x128xf32, #tpu.memory_space<vmem>>, vector<8x128xf32>
    tpu.vector_store %arg5[%c0_110, %c0_111], %268 {strides = array<i32>} : memref<8x128xf32, #tpu.memory_space<vmem>>, vector<8x128xf32>,
    %273 = arith.index_cast %c6_i32 : i32 to index
    %c0_112 = arith.constant 0 : index
    %c0_113 = arith.constant 0 : index
    %274 = vector.load %arg3[%273, %c0_112, %c0_113] : memref<8x8x128xf32, #tpu.memory_space<vmem>>, vector<1x8x128xf32>
    %275 = vector.shape_cast %274 : vector<1x8x128xf32> to vector<8x128xf32>
    %276 = vector.shape_cast %270 : vector<8x128xf32> to vector<1x8x128xf32>
    tpu.vector_store %arg3[%273, %c0_112, %c0_113], %276 {strides = array<i32>} : memref<8x8x128xf32, #tpu.memory_space<vmem>>, vector<1x8x128xf32>,
    %c7_i32 = arith.constant 7 : i32
    %c0_114 = arith.constant 0 : index
    %c0_115 = arith.constant 0 : index
    %277 = vector.load %arg4[%c0_114, %c0_115] : memref<8x128xf32, #tpu.memory_space<vmem>>, vector<8x128xf32>
    %c0_116 = arith.constant 0 : index
    %c0_117 = arith.constant 0 : index
    %278 = vector.load %arg5[%c0_116, %c0_117] : memref<8x128xf32, #tpu.memory_space<vmem>>, vector<8x128xf32>
    %279 = arith.index_cast %c7_i32 : i32 to index
    %c0_118 = arith.constant 0 : index
    %c0_119 = arith.constant 0 : index
    %280 = vector.load %arg1[%279, %c0_118, %c0_119] : memref<8x8x512xf32, #tpu.memory_space<vmem>>, vector<1x8x512xf32>
    %281 = vector.shape_cast %280 : vector<1x8x512xf32> to vector<8x512xf32>
    %282 = arith.truncf %277 : vector<8x128xf32> to vector<8x128xbf16>
    %cst_120 = arith.constant dense<0.000000e+00> : vector<8x512xf32>
    %283 = tpu.matmul %282, %3, %cst_120 {dimension_numbers = #tpu.dot_dimension_numbers<[1], [0], [0], [1], [0, 0, 1, 1], [], []>} : vector<8x128xbf16>, vector<128x512xbf16>, vector<8x512xf32> -> vector<8x512xf32>
    %284 = arith.addf %281, %283 : vector<8x512xf32>
    %285 = vector.extract_strided_slice %284 {offsets = [0, 0], sizes = [8, 128], strides = [1, 1]} : vector<8x512xf32> to vector<8x128xf32>
    %286 = arith.negf %285 : vector<8x128xf32>
    %287 = math.exp %286 : vector<8x128xf32>
    %cst_121 = arith.constant 1.000000e+00 : f32
    %288 = vector.broadcast %cst_121 : f32 to vector<8x128xf32>
    %289 = arith.addf %288, %287 : vector<8x128xf32>
    %290 = arith.divf %288, %289 : vector<8x128xf32>
    %291 = vector.extract_strided_slice %284 {offsets = [0, 128], sizes = [8, 128], strides = [1, 1]} : vector<8x512xf32> to vector<8x128xf32>
    %292 = arith.negf %291 : vector<8x128xf32>
    %293 = math.exp %292 : vector<8x128xf32>
    %cst_122 = arith.constant 1.000000e+00 : f32
    %294 = vector.broadcast %cst_122 : f32 to vector<8x128xf32>
    %295 = arith.addf %294, %293 : vector<8x128xf32>
    %296 = arith.divf %294, %295 : vector<8x128xf32>
    %297 = vector.extract_strided_slice %284 {offsets = [0, 256], sizes = [8, 128], strides = [1, 1]} : vector<8x512xf32> to vector<8x128xf32>
    %298 = math.tanh %297 : vector<8x128xf32>
    %299 = vector.extract_strided_slice %284 {offsets = [0, 384], sizes = [8, 128], strides = [1, 1]} : vector<8x512xf32> to vector<8x128xf32>
    %300 = arith.negf %299 : vector<8x128xf32>
    %301 = math.exp %300 : vector<8x128xf32>
    %cst_123 = arith.constant 1.000000e+00 : f32
    %302 = vector.broadcast %cst_123 : f32 to vector<8x128xf32>
    %303 = arith.addf %302, %301 : vector<8x128xf32>
    %304 = arith.divf %302, %303 : vector<8x128xf32>
    %305 = arith.mulf %296, %278 : vector<8x128xf32>
    %306 = arith.mulf %290, %298 : vector<8x128xf32>
    %307 = arith.addf %305, %306 : vector<8x128xf32>
    %308 = math.tanh %307 : vector<8x128xf32>
    %309 = arith.mulf %304, %308 : vector<8x128xf32>
    %c0_124 = arith.constant 0 : index
    %c0_125 = arith.constant 0 : index
    %310 = vector.load %arg4[%c0_124, %c0_125] : memref<8x128xf32, #tpu.memory_space<vmem>>, vector<8x128xf32>
    tpu.vector_store %arg4[%c0_124, %c0_125], %309 {strides = array<i32>} : memref<8x128xf32, #tpu.memory_space<vmem>>, vector<8x128xf32>,
    %c0_126 = arith.constant 0 : index
    %c0_127 = arith.constant 0 : index
    %311 = vector.load %arg5[%c0_126, %c0_127] : memref<8x128xf32, #tpu.memory_space<vmem>>, vector<8x128xf32>
    tpu.vector_store %arg5[%c0_126, %c0_127], %307 {strides = array<i32>} : memref<8x128xf32, #tpu.memory_space<vmem>>, vector<8x128xf32>,
    %312 = arith.index_cast %c7_i32 : i32 to index
    %c0_128 = arith.constant 0 : index
    %c0_129 = arith.constant 0 : index
    %313 = vector.load %arg3[%312, %c0_128, %c0_129] : memref<8x8x128xf32, #tpu.memory_space<vmem>>, vector<1x8x128xf32>
    %314 = vector.shape_cast %313 : vector<1x8x128xf32> to vector<8x128xf32>
    %315 = vector.shape_cast %309 : vector<8x128xf32> to vector<1x8x128xf32>
    tpu.vector_store %arg3[%312, %c0_128, %c0_129], %315 {strides = array<i32>} : memref<8x8x128xf32, #tpu.memory_space<vmem>>, vector<1x8x128xf32>,
    %c8_i32 = arith.constant 8 : i32
    return
  }
  func.func @transform_0(%arg0: i32) -> (i32, i32, i32) {
    %c0_i32 = arith.constant 0 : i32
    %c0_i32_0 = arith.constant 0 : i32
    %c0_i32_1 = arith.constant 0 : i32
    return %arg0, %c0_i32, %c0_i32_0 : i32, i32, i32
  }
  func.func @transform_1(%arg0: i32) -> (i32, i32) {
    %c0_i32 = arith.constant 0 : i32
    %c0_i32_0 = arith.constant 0 : i32
    %c0_i32_1 = arith.constant 0 : i32
    return %c0_i32, %c0_i32_0 : i32, i32
  }
  func.func @transform_2(%arg0: i32) -> (i32, i32, i32) {
    %c0_i32 = arith.constant 0 : i32
    %c0_i32_0 = arith.constant 0 : i32
    %c0_i32_1 = arith.constant 0 : i32
    return %arg0, %c0_i32, %c0_i32_0 : i32, i32, i32
  }
}

</mosaic_0001>

<llo_original>
// kernel: tpu_custom_call.1
$region0: #{tpu_custom_call.1}
  #allocation0 [shape = 'u32[]', space=smem, size = 0x4, offset = 0x4, fixed_abs, tag = 'smem constant byte address 0x4 - core index']
  #allocation1 [shape = 'u32[144,128]{1,0:T(1,128)}', space=vmem, size = 0x12000, scoped, tag = 'internal scratch']
  #allocation2 [shape = 'f32[8,128]{1,0:T(8,128)}', space=vmem, size = 0x1000, scoped, tag = 'scratch operand']
  #allocation3 [shape = 'f32[8,128]{1,0:T(8,128)}', space=vmem, size = 0x1000, scoped, tag = 'scratch operand']
  %s0 = inlined_call_operand.hbm [shape: f32[8,8,512], index: 0, kind: input, shape index: {}]
  %s1 = inlined_call_operand.hbm [shape: bf16[128,512], index: 1, kind: input, shape index: {}]
  %s2 = inlined_call_operand.hbm [shape: f32[8,8,128], index: 2, kind: output, shape index: {}]
  %s3 = sld [smem:[#allocation0]]
  $region30: #{tpu_custom_call.1} parent=0
    _
  %s5 = ssub.s32 1, %s3
  %s6 = scalar_select 0, %s5, %s3
  $region1: #{tpu_custom_call.1} parent=0
    #allocation4 [shape = 'u8[131072]{0}', space=vmem, size = 0x20000, scoped, tag = 'input window, operand 0, single buffered']
    #allocation5 [shape = 's32[1]{0}', space=sflag, size = 0x4, scoped, tag = 'scoped memory for tpu_custom_call.1']
    #allocation6 [shape = 's32[1]{0}', space=sflag, size = 0x4, scoped, tag = 'scoped memory for tpu_custom_call.1']
    #allocation7 [shape = 'u8[131072]{0}', space=vmem, size = 0x20000, scoped, tag = 'input window, operand 1, single buffered']
    #allocation8 [shape = 's32[1]{0}', space=sflag, size = 0x4, scoped, tag = 'scoped memory for tpu_custom_call.1']
    #allocation9 [shape = 'u8[32768]{0}', space=vmem, size = 0x8000, scoped, tag = 'output window, operand 0, single buffered']
    %7 = vsyncpa [#allocation5], 0
    %8 = vsyncpa [#allocation8], 0
    %9 = vsyncpa [#allocation6], 0
    // Predicated region
    $region2: #{tpu_custom_call.1} parent=1 // pred_check
      _
    $region3: #{tpu_custom_call.1} parent=1 // pred_check_branch
      %11 = sbr.rel (0) target = $region5
    $region4: #{tpu_custom_call.1} parent=1 // pred_region
      %s13 = ssub.s32 4096, 4096
      %14 = vsyncadd [#allocation5], %s13
      %s15 = sshll.u32 [#allocation4], 4
      %s16 = int_to_ptr.vmem [resolvable:$true] %s15
      %21 = dma.hbm_to_vmem [thread:$0]  %s0, 4096, %s16, [#allocation5], 512, 512, 32
    $region5: #{tpu_custom_call.1} parent=1 // pred_fallthru
      _
    // Predicated region
    $region6: #{tpu_custom_call.1} parent=1 // pred_check
      _
    $region7: #{tpu_custom_call.1} parent=1 // pred_check_branch
      %23 = sbr.rel (0) target = $region9
    $region8: #{tpu_custom_call.1} parent=1 // pred_region
      %s25 = ssub.s32 4096, 4096
      %26 = vsyncadd [#allocation8], %s25
      %s27 = sshll.u32 [#allocation7], 4
      %s28 = int_to_ptr.vmem [resolvable:$true] %s27
      %33 = dma.hbm_to_vmem [thread:$0]  %s1, 4096, %s28, [#allocation8], 256, 256, 16
    $region9: #{tpu_custom_call.1} parent=1 // pred_fallthru
      _
    // Predicated region
    $region10: #{tpu_custom_call.1} parent=1 // pred_check
      _
    $region11: #{tpu_custom_call.1} parent=1 // pred_check_branch
      %35 = sbr.rel (0) target = $region13
    $region12: #{tpu_custom_call.1} parent=1 // pred_region
      %36 = dma.done [#allocation5], 4096
    $region13: #{tpu_custom_call.1} parent=1 // pred_fallthru
      _
    // Predicated region
    $region14: #{tpu_custom_call.1} parent=1 // pred_check
      _
    $region15: #{tpu_custom_call.1} parent=1 // pred_check_branch
      %38 = sbr.rel (0) target = $region17
    $region16: #{tpu_custom_call.1} parent=1 // pred_region
      %39 = dma.done [#allocation8], 4096
    $region17: #{tpu_custom_call.1} parent=1 // pred_fallthru
      _
    %p41 = scmp.eq.s32.totalorder 0, 0
    // Predicated region
    $region18: #{tpu_custom_call.1} parent=1 // pred_check
      %p42 = pneg %p41
    $region19: #{tpu_custom_call.1} parent=1 // pred_check_branch
      %44 = sbr.rel (%p42) target = $region21
    $region20: #{tpu_custom_call.1} parent=1 // pred_region
      %45 = vst [vmem:[#allocation2] sm:$0xff] 0.0
      %46 = vst [vmem:[#allocation3] sm:$0xff] 0.0
    $region21: #{tpu_custom_call.1} parent=1 // pred_fallthru
      _
    %v47 = vld [vmem:[#allocation7] sm:$0xff]
    %v48 = vld [vmem:[#allocation7 + $0x8] sm:$0xff]
    %v49 = vld [vmem:[#allocation7 + $0x10] sm:$0xff]
    %v50 = vld [vmem:[#allocation7 + $0x18] sm:$0xff]
    %v51 = vld [vmem:[#allocation7 + $0x20] sm:$0xff]
    %v52 = vld [vmem:[#allocation7 + $0x28] sm:$0xff]
    %v53 = vld [vmem:[#allocation7 + $0x30] sm:$0xff]
    %v54 = vld [vmem:[#allocation7 + $0x38] sm:$0xff]
    %v55 = vld [vmem:[#allocation7 + $0x40] sm:$0xff]
    %v56 = vld [vmem:[#allocation7 + $0x48] sm:$0xff]
    %v57 = vld [vmem:[#allocation7 + $0x50] sm:$0xff]
    %v58 = vld [vmem:[#allocation7 + $0x58] sm:$0xff]
    %v59 = vld [vmem:[#allocation7 + $0x60] sm:$0xff]
    %v60 = vld [vmem:[#allocation7 + $0x68] sm:$0xff]
    %v61 = vld [vmem:[#allocation7 + $0x70] sm:$0xff]
    %v62 = vld [vmem:[#allocation7 + $0x78] sm:$0xff]
    %v63 = vld [vmem:[#allocation7 + $0x80] sm:$0xff]
    %v64 = vld [vmem:[#allocation7 + $0x88] sm:$0xff]
    %v65 = vld [vmem:[#allocation7 + $0x90] sm:$0xff]
    %v66 = vld [vmem:[#allocation7 + $0x98] sm:$0xff]
    %v67 = vld [vmem:[#allocation7 + $0xa0] sm:$0xff]
    %v68 = vld [vmem:[#allocation7 + $0xa8] sm:$0xff]
    %v69 = vld [vmem:[#allocation7 + $0xb0] sm:$0xff]
    %v70 = vld [vmem:[#allocation7 + $0xb8] sm:$0xff]
    %v71 = vld [vmem:[#allocation7 + $0xc0] sm:$0xff]
    %v72 = vld [vmem:[#allocation7 + $0xc8] sm:$0xff]
    %v73 = vld [vmem:[#allocation7 + $0xd0] sm:$0xff]
    %v74 = vld [vmem:[#allocation7 + $0xd8] sm:$0xff]
    %v75 = vld [vmem:[#allocation7 + $0xe0] sm:$0xff]
    %v76 = vld [vmem:[#allocation7 + $0xe8] sm:$0xff]
    %v77 = vld [vmem:[#allocation7 + $0xf0] sm:$0xff]
    %v78 = vld [vmem:[#allocation7 + $0xf8] sm:$0xff]
    %v79 = vld [vmem:[#allocation2] sm:$0xff]
    %v80 = vld [vmem:[#allocation3] sm:$0xff]
    %v81 = vld [vmem:[#allocation4] sm:$0xff]
    %v82 = vld [vmem:[#allocation4 + $0x8] sm:$0xff]
    %v83 = vld [vmem:[#allocation4 + $0x10] sm:$0xff]
    %v84 = vld [vmem:[#allocation4 + $0x18] sm:$0xff]
    %v85 = vpack.c.bf16 %v79, %v79
    %v118 = vunpack.c.l.b16 %v47
    %v119 = vunpack.c.h.b16 %v47
    %v120 = vunpack.c.l.b16 %v48
    %v121 = vunpack.c.h.b16 %v48
    %v122 = vunpack.c.l.b16 %v49
    %v123 = vunpack.c.h.b16 %v49
    %v124 = vunpack.c.l.b16 %v50
    %v125 = vunpack.c.h.b16 %v50
    %v126 = vunpack.c.l.b16 %v51
    %v127 = vunpack.c.h.b16 %v51
    %v128 = vunpack.c.l.b16 %v52
    %v129 = vunpack.c.h.b16 %v52
    %v130 = vunpack.c.l.b16 %v53
    %v131 = vunpack.c.h.b16 %v53
    %v132 = vunpack.c.l.b16 %v54
    %v133 = vunpack.c.h.b16 %v54
    %v134 = vunpack.c.l.b16 %v55
    %v135 = vunpack.c.h.b16 %v55
    %v136 = vunpack.c.l.b16 %v56
    %v137 = vunpack.c.h.b16 %v56
    %v138 = vunpack.c.l.b16 %v57
    %v139 = vunpack.c.h.b16 %v57
    %v140 = vunpack.c.l.b16 %v58
    %v141 = vunpack.c.h.b16 %v58
    %v142 = vunpack.c.l.b16 %v59
    %v143 = vunpack.c.h.b16 %v59
    %v144 = vunpack.c.l.b16 %v60
    %v145 = vunpack.c.h.b16 %v60
    %v146 = vunpack.c.l.b16 %v61
    %v147 = vunpack.c.h.b16 %v61
    %v148 = vunpack.c.l.b16 %v62
    %v149 = vunpack.c.h.b16 %v62
    %v150 = vunpack.c.l.b16 %v63
    %v151 = vunpack.c.h.b16 %v63
    %v152 = vunpack.c.l.b16 %v64
    %v153 = vunpack.c.h.b16 %v64
    %v154 = vunpack.c.l.b16 %v65
    %v155 = vunpack.c.h.b16 %v65
    %v156 = vunpack.c.l.b16 %v66
    %v157 = vunpack.c.h.b16 %v66
    %v158 = vunpack.c.l.b16 %v67
    %v159 = vunpack.c.h.b16 %v67
    %v160 = vunpack.c.l.b16 %v68
    %v161 = vunpack.c.h.b16 %v68
    %v162 = vunpack.c.l.b16 %v69
    %v163 = vunpack.c.h.b16 %v69
    %v164 = vunpack.c.l.b16 %v70
    %v165 = vunpack.c.h.b16 %v70
    %v166 = vunpack.c.l.b16 %v71
    %v167 = vunpack.c.h.b16 %v71
    %v168 = vunpack.c.l.b16 %v72
    %v169 = vunpack.c.h.b16 %v72
    %v170 = vunpack.c.l.b16 %v73
    %v171 = vunpack.c.h.b16 %v73
    %v172 = vunpack.c.l.b16 %v74
    %v173 = vunpack.c.h.b16 %v74
    %v174 = vunpack.c.l.b16 %v75
    %v175 = vunpack.c.h.b16 %v75
    %v176 = vunpack.c.l.b16 %v76
    %v177 = vunpack.c.h.b16 %v76
    %v178 = vunpack.c.l.b16 %v77
    %v179 = vunpack.c.h.b16 %v77
    %v180 = vunpack.c.l.b16 %v78
    %v181 = vunpack.c.h.b16 %v78
    %v182 = vpack.c.b16 %v122, %v118
    %v183 = vpack.c.b16 %v123, %v119
    %v184 = vpack.c.b16 %v124, %v120
    %v185 = vpack.c.b16 %v125, %v121
    %v186 = vpack.c.b16 %v130, %v126
    %v187 = vpack.c.b16 %v131, %v127
    %v188 = vpack.c.b16 %v132, %v128
    %v189 = vpack.c.b16 %v133, %v129
    %v190 = vpack.c.b16 %v138, %v134
    %v191 = vpack.c.b16 %v139, %v135
    %v192 = vpack.c.b16 %v140, %v136
    %v193 = vpack.c.b16 %v141, %v137
    %v194 = vpack.c.b16 %v146, %v142
    %v195 = vpack.c.b16 %v147, %v143
    %v196 = vpack.c.b16 %v148, %v144
    %v197 = vpack.c.b16 %v149, %v145
    %v198 = vpack.c.b16 %v154, %v150
    %v199 = vpack.c.b16 %v155, %v151
    %v200 = vpack.c.b16 %v156, %v152
    %v201 = vpack.c.b16 %v157, %v153
    %v202 = vpack.c.b16 %v162, %v158
    %v203 = vpack.c.b16 %v163, %v159
    %v204 = vpack.c.b16 %v164, %v160
    %v205 = vpack.c.b16 %v165, %v161
    %v206 = vpack.c.b16 %v170, %v166
    %v207 = vpack.c.b16 %v171, %v167
    %v208 = vpack.c.b16 %v172, %v168
    %v209 = vpack.c.b16 %v173, %v169
    %v210 = vpack.c.b16 %v178, %v174
    %v211 = vpack.c.b16 %v179, %v175
    %v212 = vpack.c.b16 %v180, %v176
    %v213 = vpack.c.b16 %v181, %v177
    %246 = vmatprep.subr.bf16.mxu0 %v211
    %247 = vmatpush1.bf16.msra.mxu0 %v210
    %248 = vmatprep.subr.bf16.mxu0 %v207
    %249 = vmatpush1.bf16.msra.mxu0 %v206
    %250 = vmatprep.subr.bf16.mxu0 %v203
    %251 = vmatpush1.bf16.msra.mxu0 %v202
    %252 = vmatprep.subr.bf16.mxu0 %v199
    %253 = vmatpush1.bf16.msra.mxu0 %v198
    %254 = vmatprep.subr.bf16.mxu0 %v195
    %255 = vmatpush1.bf16.msra.mxu0 %v194
    %256 = vmatprep.subr.bf16.mxu0 %v191
    %257 = vmatpush1.bf16.msra.mxu0 %v190
    %258 = vmatprep.subr.bf16.mxu0 %v187
    %259 = vmatpush1.bf16.msra.mxu0 %v186
    %260 = vmatprep.subr.bf16.mxu0 %v183
    %261 = vmatpush1.bf16.msra.mxu0 %v182
    %262 = vmatprep.subr.bf16.mxu0 0
    %263 = vmatpush2.bf16.msra.mxu0 0
    %264 = vmatprep.subr.bf16.mxu0 0
    %265 = vmatpush2.bf16.msra.mxu0 0
    %266 = vmatprep.subr.bf16.mxu0 0
    %267 = vmatpush2.bf16.msra.mxu0 0
    %268 = vmatprep.subr.bf16.mxu0 0
    %269 = vmatpush2.bf16.msra.mxu0 0
    %270 = vmatprep.subr.bf16.mxu0 0
    %271 = vmatpush2.bf16.msra.mxu0 0
    %272 = vmatprep.subr.bf16.mxu0 0
    %273 = vmatpush2.bf16.msra.mxu0 0
    %274 = vmatprep.subr.bf16.mxu0 0
    %275 = vmatpush2.bf16.msra.mxu0 0
    %276 = vmatprep.subr.bf16.mxu0 0
    %277 = vmatpush2.bf16.msra.mxu0 0
    %278 = vmatprep.mubr.bf16.mxu0 0
    %279 = vmatmul.mubr.bf16.gmra.mxu0 %v85
    %v280 = vpop.f32.mrf.mxu0
    %v281 = vadd.f32 0.0, %v280
    %v282 = vpop.f32.mrf.mxu0
    %v283 = vadd.f32 0.0, %v282
    %v284 = vpop.f32.mrf.mxu0
    %v285 = vpop.f32.mrf.mxu0
    %286 = vdwg.mxu0
    %287 = vmatprep.subr.bf16.mxu0 %v213
    %288 = vmatpush1.bf16.msra.mxu0 %v212
    %289 = vmatprep.subr.bf16.mxu0 %v209
    %290 = vmatpush1.bf16.msra.mxu0 %v208
    %291 = vmatprep.subr.bf16.mxu0 %v205
    %292 = vmatpush1.bf16.msra.mxu0 %v204
    %293 = vmatprep.subr.bf16.mxu0 %v201
    %294 = vmatpush1.bf16.msra.mxu0 %v200
    %295 = vmatprep.subr.bf16.mxu0 %v197
    %296 = vmatpush1.bf16.msra.mxu0 %v196
    %297 = vmatprep.subr.bf16.mxu0 %v193
    %298 = vmatpush1.bf16.msra.mxu0 %v192
    %299 = vmatprep.subr.bf16.mxu0 %v189
    %300 = vmatpush1.bf16.msra.mxu0 %v188
    %301 = vmatprep.subr.bf16.mxu0 %v185
    %302 = vmatpush1.bf16.msra.mxu0 %v184
    %303 = vmatprep.subr.bf16.mxu0 0
    %304 = vmatpush2.bf16.msra.mxu0 0
    %305 = vmatprep.subr.bf16.mxu0 0
    %306 = vmatpush2.bf16.msra.mxu0 0
    %307 = vmatprep.subr.bf16.mxu0 0
    %308 = vmatpush2.bf16.msra.mxu0 0
    %309 = vmatprep.subr.bf16.mxu0 0
    %310 = vmatpush2.bf16.msra.mxu0 0
    %311 = vmatprep.subr.bf16.mxu0 0
    %312 = vmatpush2.bf16.msra.mxu0 0
    %313 = vmatprep.subr.bf16.mxu0 0
    %314 = vmatpush2.bf16.msra.mxu0 0
    %315 = vmatprep.subr.bf16.mxu0 0
    %316 = vmatpush2.bf16.msra.mxu0 0
    %317 = vmatprep.subr.bf16.mxu0 0
    %318 = vmatpush2.bf16.msra.mxu0 0
    %319 = vmatprep.mubr.bf16.mxu0 0
    %320 = vmatmul.mubr.bf16.gmra.mxu0 %v85
    %v321 = vpop.f32.mrf.mxu0
    %v322 = vadd.f32 0.0, %v321
    %v323 = vpop.f32.mrf.mxu0
    %v324 = vadd.f32 0.0, %v323
    %v325 = vpop.f32.mrf.mxu0
    %v326 = vpop.f32.mrf.mxu0
    %327 = vdwg.mxu0
    %v328 = vadd.f32 %v81, %v281
    %v329 = vadd.f32 %v82, %v283
    %v330 = vadd.f32 %v83, %v322
    %v331 = vadd.f32 %v84, %v324
    %v332 = vxor.u32 %v328, 2147483648
    %v333 = vmul.f32 %v332, 1.442695
    %v334 = vpow.pop %v333
    %v335 = vadd.f32 %v334, 1.0
    %v336 = vrcp.pop %v335
    %v337 = vmul.f32 1.0, %v336
    %v338 = vxor.u32 %v329, 2147483648
    %v339 = vmul.f32 %v338, 1.442695
    %v340 = vpow.pop %v339
    %v341 = vadd.f32 %v340, 1.0
    %v342 = vrcp.pop %v341
    %v343 = vmul.f32 1.0, %v342
    %v344 = vtanh.pop %v330
    %v345 = vxor.u32 %v331, 2147483648
    %v346 = vmul.f32 %v345, 1.442695
    %v347 = vpow.pop %v346
    %v348 = vadd.f32 %v347, 1.0
    %v349 = vrcp.pop %v348
    %v350 = vmul.f32 1.0, %v349
    %v351 = vmul.f32 %v343, %v80
    %v352 = vmul.f32 %v337, %v344
    %v353 = vadd.f32 %v351, %v352
    %v354 = vtanh.pop %v353
    %v355 = vmul.f32 %v350, %v354
    %356 = vst [vmem:[#allocation2] sm:$0xff] %v355
    %357 = vst [vmem:[#allocation3] sm:$0xff] %v353
    %358 = vst [vmem:[#allocation9] sm:$0xff] %v355
    %v359 = vld [vmem:[#allocation2] sm:$0xff]
    %v360 = vld [vmem:[#allocation3] sm:$0xff]
    %s361 = scalar_lea.vmem [#allocation4], 32
    %v362 = vld [vmem:[%s361] sm:$0xff]
    %v363 = vld [vmem:[%s361 + $0x8] sm:$0xff]
    %v364 = vld [vmem:[%s361 + $0x10] sm:$0xff]
    %v365 = vld [vmem:[%s361 + $0x18] sm:$0xff]
    %v366 = vpack.c.bf16 %v359, %v359
    %367 = vmatprep.subr.bf16.mxu0 %v211
    %368 = vmatpush1.bf16.msra.mxu0 %v210
    %369 = vmatprep.subr.bf16.mxu0 %v207
    %370 = vmatpush1.bf16.msra.mxu0 %v206
    %371 = vmatprep.subr.bf16.mxu0 %v203
    %372 = vmatpush1.bf16.msra.mxu0 %v202
    %373 = vmatprep.subr.bf16.mxu0 %v199
    %374 = vmatpush1.bf16.msra.mxu0 %v198
    %375 = vmatprep.subr.bf16.mxu0 %v195
    %376 = vmatpush1.bf16.msra.mxu0 %v194
    %377 = vmatprep.subr.bf16.mxu0 %v191
    %378 = vmatpush1.bf16.msra.mxu0 %v190
    %379 = vmatprep.subr.bf16.mxu0 %v187
    %380 = vmatpush1.bf16.msra.mxu0 %v186
    %381 = vmatprep.subr.bf16.mxu0 %v183
    %382 = vmatpush1.bf16.msra.mxu0 %v182
    %383 = vmatprep.subr.bf16.mxu0 0
    %384 = vmatpush2.bf16.msra.mxu0 0
    %385 = vmatprep.subr.bf16.mxu0 0
    %386 = vmatpush2.bf16.msra.mxu0 0
    %387 = vmatprep.subr.bf16.mxu0 0
    %388 = vmatpush2.bf16.msra.mxu0 0
    %389 = vmatprep.subr.bf16.mxu0 0
    %390 = vmatpush2.bf16.msra.mxu0 0
    %391 = vmatprep.subr.bf16.mxu0 0
    %392 = vmatpush2.bf16.msra.mxu0 0
    %393 = vmatprep.subr.bf16.mxu0 0
    %394 = vmatpush2.bf16.msra.mxu0 0
    %395 = vmatprep.subr.bf16.mxu0 0
    %396 = vmatpush2.bf16.msra.mxu0 0
    %397 = vmatprep.subr.bf16.mxu0 0
    %398 = vmatpush2.bf16.msra.mxu0 0
    %399 = vmatprep.mubr.bf16.mxu0 0
    %400 = vmatmul.mubr.bf16.gmra.mxu0 %v366
    %v401 = vpop.f32.mrf.mxu0
    %v402 = vadd.f32 0.0, %v401
    %v403 = vpop.f32.mrf.mxu0
    %v404 = vadd.f32 0.0, %v403
    %v405 = vpop.f32.mrf.mxu0
    %v406 = vpop.f32.mrf.mxu0
    %407 = vdwg.mxu0
    %408 = vmatprep.subr.bf16.mxu0 %v213
    %409 = vmatpush1.bf16.msra.mxu0 %v212
    %410 = vmatprep.subr.bf16.mxu0 %v209
    %411 = vmatpush1.bf16.msra.mxu0 %v208
    %412 = vmatprep.subr.bf16.mxu0 %v205
    %413 = vmatpush1.bf16.msra.mxu0 %v204
    %414 = vmatprep.subr.bf16.mxu0 %v201
    %415 = vmatpush1.bf16.msra.mxu0 %v200
    %416 = vmatprep.subr.bf16.mxu0 %v197
    %417 = vmatpush1.bf16.msra.mxu0 %v196
    %418 = vmatprep.subr.bf16.mxu0 %v193
    %419 = vmatpush1.bf16.msra.mxu0 %v192
    %420 = vmatprep.subr.bf16.mxu0 %v189
    %421 = vmatpush1.bf16.msra.mxu0 %v188
    %422 = vmatprep.subr.bf16.mxu0 %v185
    %423 = vmatpush1.bf16.msra.mxu0 %v184
    %424 = vmatprep.subr.bf16.mxu0 0
    %425 = vmatpush2.bf16.msra.mxu0 0
    %426 = vmatprep.subr.bf16.mxu0 0
    %427 = vmatpush2.bf16.msra.mxu0 0
    %428 = vmatprep.subr.bf16.mxu0 0
    %429 = vmatpush2.bf16.msra.mxu0 0
    %430 = vmatprep.subr.bf16.mxu0 0
    %431 = vmatpush2.bf16.msra.mxu0 0
    %432 = vmatprep.subr.bf16.mxu0 0
    %433 = vmatpush2.bf16.msra.mxu0 0
    %434 = vmatprep.subr.bf16.mxu0 0
    %435 = vmatpush2.bf16.msra.mxu0 0
    %436 = vmatprep.subr.bf16.mxu0 0
    %437 = vmatpush2.bf16.msra.mxu0 0
    %438 = vmatprep.subr.bf16.mxu0 0
    %439 = vmatpush2.bf16.msra.mxu0 0
    %440 = vmatprep.mubr.bf16.mxu0 0
    %441 = vmatmul.mubr.bf16.gmra.mxu0 %v366
    %v442 = vpop.f32.mrf.mxu0
    %v443 = vadd.f32 0.0, %v442
    %v444 = vpop.f32.mrf.mxu0
    %v445 = vadd.f32 0.0, %v444
    %v446 = vpop.f32.mrf.mxu0
    %v447 = vpop.f32.mrf.mxu0
    %448 = vdwg.mxu0
    %v449 = vadd.f32 %v362, %v402
    %v450 = vadd.f32 %v363, %v404
    %v451 = vadd.f32 %v364, %v443
    %v452 = vadd.f32 %v365, %v445
    %v453 = vxor.u32 %v449, 2147483648
    %v454 = vmul.f32 %v453, 1.442695
    %v455 = vpow.pop %v454
    %v456 = vadd.f32 %v455, 1.0
    %v457 = vrcp.pop %v456
    %v458 = vmul.f32 1.0, %v457
    %v459 = vxor.u32 %v450, 2147483648
    %v460 = vmul.f32 %v459, 1.442695
    %v461 = vpow.pop %v460
    %v462 = vadd.f32 %v461, 1.0
    %v463 = vrcp.pop %v462
    %v464 = vmul.f32 1.0, %v463
    %v465 = vtanh.pop %v451
    %v466 = vxor.u32 %v452, 2147483648
    %v467 = vmul.f32 %v466, 1.442695
    %v468 = vpow.pop %v467
    %v469 = vadd.f32 %v468, 1.0
    %v470 = vrcp.pop %v469
    %v471 = vmul.f32 1.0, %v470
    %v472 = vmul.f32 %v464, %v360
    %v473 = vmul.f32 %v458, %v465
    %v474 = vadd.f32 %v472, %v473
    %v475 = vtanh.pop %v474
    %v476 = vmul.f32 %v471, %v475
    %477 = vst [vmem:[#allocation2] sm:$0xff] %v476
    %478 = vst [vmem:[#allocation3] sm:$0xff] %v474
    %s479 = scalar_lea.vmem [#allocation9], 8
    %480 = vst [vmem:[%s479] sm:$0xff] %v476
    %v481 = vld [vmem:[#allocation2] sm:$0xff]
    %v482 = vld [vmem:[#allocation3] sm:$0xff]
    %s483 = scalar_lea.vmem [#allocation4], 64
    %v484 = vld [vmem:[%s483] sm:$0xff]
    %v485 = vld [vmem:[%s483 + $0x8] sm:$0xff]
    %v486 = vld [vmem:[%s483 + $0x10] sm:$0xff]
    %v487 = vld [vmem:[%s483 + $0x18] sm:$0xff]
    %v488 = vpack.c.bf16 %v481, %v481
    %489 = vmatprep.subr.bf16.mxu0 %v211
    %490 = vmatpush1.bf16.msra.mxu0 %v210
    %491 = vmatprep.subr.bf16.mxu0 %v207
    %492 = vmatpush1.bf16.msra.mxu0 %v206
    %493 = vmatprep.subr.bf16.mxu0 %v203
    %494 = vmatpush1.bf16.msra.mxu0 %v202
    %495 = vmatprep.subr.bf16.mxu0 %v199
    %496 = vmatpush1.bf16.msra.mxu0 %v198
    %497 = vmatprep.subr.bf16.mxu0 %v195
    %498 = vmatpush1.bf16.msra.mxu0 %v194
    %499 = vmatprep.subr.bf16.mxu0 %v191
    %500 = vmatpush1.bf16.msra.mxu0 %v190
    %501 = vmatprep.subr.bf16.mxu0 %v187
    %502 = vmatpush1.bf16.msra.mxu0 %v186
    %503 = vmatprep.subr.bf16.mxu0 %v183
    %504 = vmatpush1.bf16.msra.mxu0 %v182
    %505 = vmatprep.subr.bf16.mxu0 0
    %506 = vmatpush2.bf16.msra.mxu0 0
    %507 = vmatprep.subr.bf16.mxu0 0
    %508 = vmatpush2.bf16.msra.mxu0 0
    %509 = vmatprep.subr.bf16.mxu0 0
    %510 = vmatpush2.bf16.msra.mxu0 0
    %511 = vmatprep.subr.bf16.mxu0 0
    %512 = vmatpush2.bf16.msra.mxu0 0
    %513 = vmatprep.subr.bf16.mxu0 0
    %514 = vmatpush2.bf16.msra.mxu0 0
    %515 = vmatprep.subr.bf16.mxu0 0
    %516 = vmatpush2.bf16.msra.mxu0 0
    %517 = vmatprep.subr.bf16.mxu0 0
    %518 = vmatpush2.bf16.msra.mxu0 0
    %519 = vmatprep.subr.bf16.mxu0 0
    %520 = vmatpush2.bf16.msra.mxu0 0
    %521 = vmatprep.mubr.bf16.mxu0 0
    %522 = vmatmul.mubr.bf16.gmra.mxu0 %v488
    %v523 = vpop.f32.mrf.mxu0
    %v524 = vadd.f32 0.0, %v523
    %v525 = vpop.f32.mrf.mxu0
    %v526 = vadd.f32 0.0, %v525
    %v527 = vpop.f32.mrf.mxu0
    %v528 = vpop.f32.mrf.mxu0
    %529 = vdwg.mxu0
    %530 = vmatprep.subr.bf16.mxu0 %v213
    %531 = vmatpush1.bf16.msra.mxu0 %v212
    %532 = vmatprep.subr.bf16.mxu0 %v209
    %533 = vmatpush1.bf16.msra.mxu0 %v208
    %534 = vmatprep.subr.bf16.mxu0 %v205
    %535 = vmatpush1.bf16.msra.mxu0 %v204
    %536 = vmatprep.subr.bf16.mxu0 %v201
    %537 = vmatpush1.bf16.msra.mxu0 %v200
    %538 = vmatprep.subr.bf16.mxu0 %v197
    %539 = vmatpush1.bf16.msra.mxu0 %v196
    %540 = vmatprep.subr.bf16.mxu0 %v193
    %541 = vmatpush1.bf16.msra.mxu0 %v192
    %542 = vmatprep.subr.bf16.mxu0 %v189
    %543 = vmatpush1.bf16.msra.mxu0 %v188
    %544 = vmatprep.subr.bf16.mxu0 %v185
    %545 = vmatpush1.bf16.msra.mxu0 %v184
    %546 = vmatprep.subr.bf16.mxu0 0
    %547 = vmatpush2.bf16.msra.mxu0 0
    %548 = vmatprep.subr.bf16.mxu0 0
    %549 = vmatpush2.bf16.msra.mxu0 0
    %550 = vmatprep.subr.bf16.mxu0 0
    %551 = vmatpush2.bf16.msra.mxu0 0
    %552 = vmatprep.subr.bf16.mxu0 0
    %553 = vmatpush2.bf16.msra.mxu0 0
    %554 = vmatprep.subr.bf16.mxu0 0
    %555 = vmatpush2.bf16.msra.mxu0 0
    %556 = vmatprep.subr.bf16.mxu0 0
    %557 = vmatpush2.bf16.msra.mxu0 0
    %558 = vmatprep.subr.bf16.mxu0 0
    %559 = vmatpush2.bf16.msra.mxu0 0
    %560 = vmatprep.subr.bf16.mxu0 0
    %561 = vmatpush2.bf16.msra.mxu0 0
    %562 = vmatprep.mubr.bf16.mxu0 0
    %563 = vmatmul.mubr.bf16.gmra.mxu0 %v488
    %v564 = vpop.f32.mrf.mxu0
    %v565 = vadd.f32 0.0, %v564
    %v566 = vpop.f32.mrf.mxu0
    %v567 = vadd.f32 0.0, %v566
    %v568 = vpop.f32.mrf.mxu0
    %v569 = vpop.f32.mrf.mxu0
    %570 = vdwg.mxu0
    %v571 = vadd.f32 %v484, %v524
    %v572 = vadd.f32 %v485, %v526
    %v573 = vadd.f32 %v486, %v565
    %v574 = vadd.f32 %v487, %v567
    %v575 = vxor.u32 %v571, 2147483648
    %v576 = vmul.f32 %v575, 1.442695
    %v577 = vpow.pop %v576
    %v578 = vadd.f32 %v577, 1.0
    %v579 = vrcp.pop %v578
    %v580 = vmul.f32 1.0, %v579
    %v581 = vxor.u32 %v572, 2147483648
    %v582 = vmul.f32 %v581, 1.442695
    %v583 = vpow.pop %v582
    %v584 = vadd.f32 %v583, 1.0
    %v585 = vrcp.pop %v584
    %v586 = vmul.f32 1.0, %v585
    %v587 = vtanh.pop %v573
    %v588 = vxor.u32 %v574, 2147483648
    %v589 = vmul.f32 %v588, 1.442695
    %v590 = vpow.pop %v589
    %v591 = vadd.f32 %v590, 1.0
    %v592 = vrcp.pop %v591
    %v593 = vmul.f32 1.0, %v592
    %v594 = vmul.f32 %v586, %v482
    %v595 = vmul.f32 %v580, %v587
    %v596 = vadd.f32 %v594, %v595
    %v597 = vtanh.pop %v596
    %v598 = vmul.f32 %v593, %v597
    %599 = vst [vmem:[#allocation2] sm:$0xff] %v598
    %600 = vst [vmem:[#allocation3] sm:$0xff] %v596
    %s601 = scalar_lea.vmem [#allocation9], 16
    %602 = vst [vmem:[%s601] sm:$0xff] %v598
    %v603 = vld [vmem:[#allocation2] sm:$0xff]
    %v604 = vld [vmem:[#allocation3] sm:$0xff]
    %s605 = scalar_lea.vmem [#allocation4], 96
    %v606 = vld [vmem:[%s605] sm:$0xff]
    %v607 = vld [vmem:[%s605 + $0x8] sm:$0xff]
    %v608 = vld [vmem:[%s605 + $0x10] sm:$0xff]
    %v609 = vld [vmem:[%s605 + $0x18] sm:$0xff]
    %v610 = vpack.c.bf16 %v603, %v603
    %611 = vmatprep.subr.bf16.mxu0 %v211
    %612 = vmatpush1.bf16.msra.mxu0 %v210
    %613 = vmatprep.subr.bf16.mxu0 %v207
    %614 = vmatpush1.bf16.msra.mxu0 %v206
    %615 = vmatprep.subr.bf16.mxu0 %v203
    %616 = vmatpush1.bf16.msra.mxu0 %v202
    %617 = vmatprep.subr.bf16.mxu0 %v199
    %618 = vmatpush1.bf16.msra.mxu0 %v198
    %619 = vmatprep.subr.bf16.mxu0 %v195
    %620 = vmatpush1.bf16.msra.mxu0 %v194
    %621 = vmatprep.subr.bf16.mxu0 %v191
    %622 = vmatpush1.bf16.msra.mxu0 %v190
    %623 = vmatprep.subr.bf16.mxu0 %v187
    %624 = vmatpush1.bf16.msra.mxu0 %v186
    %625 = vmatprep.subr.bf16.mxu0 %v183
    %626 = vmatpush1.bf16.msra.mxu0 %v182
    %627 = vmatprep.subr.bf16.mxu0 0
    %628 = vmatpush2.bf16.msra.mxu0 0
    %629 = vmatprep.subr.bf16.mxu0 0
    %630 = vmatpush2.bf16.msra.mxu0 0
    %631 = vmatprep.subr.bf16.mxu0 0
    %632 = vmatpush2.bf16.msra.mxu0 0
    %633 = vmatprep.subr.bf16.mxu0 0
    %634 = vmatpush2.bf16.msra.mxu0 0
    %635 = vmatprep.subr.bf16.mxu0 0
    %636 = vmatpush2.bf16.msra.mxu0 0
    %637 = vmatprep.subr.bf16.mxu0 0
    %638 = vmatpush2.bf16.msra.mxu0 0
    %639 = vmatprep.subr.bf16.mxu0 0
    %640 = vmatpush2.bf16.msra.mxu0 0
    %641 = vmatprep.subr.bf16.mxu0 0
    %642 = vmatpush2.bf16.msra.mxu0 0
    %643 = vmatprep.mubr.bf16.mxu0 0
    %644 = vmatmul.mubr.bf16.gmra.mxu0 %v610
    %v645 = vpop.f32.mrf.mxu0
    %v646 = vadd.f32 0.0, %v645
    %v647 = vpop.f32.mrf.mxu0
    %v648 = vadd.f32 0.0, %v647
    %v649 = vpop.f32.mrf.mxu0
    %v650 = vpop.f32.mrf.mxu0
    %651 = vdwg.mxu0
    %652 = vmatprep.subr.bf16.mxu0 %v213
    %653 = vmatpush1.bf16.msra.mxu0 %v212
    %654 = vmatprep.subr.bf16.mxu0 %v209
    %655 = vmatpush1.bf16.msra.mxu0 %v208
    %656 = vmatprep.subr.bf16.mxu0 %v205
    %657 = vmatpush1.bf16.msra.mxu0 %v204
    %658 = vmatprep.subr.bf16.mxu0 %v201
    %659 = vmatpush1.bf16.msra.mxu0 %v200
    %660 = vmatprep.subr.bf16.mxu0 %v197
    %661 = vmatpush1.bf16.msra.mxu0 %v196
    %662 = vmatprep.subr.bf16.mxu0 %v193
    %663 = vmatpush1.bf16.msra.mxu0 %v192
    %664 = vmatprep.subr.bf16.mxu0 %v189
    %665 = vmatpush1.bf16.msra.mxu0 %v188
    %666 = vmatprep.subr.bf16.mxu0 %v185
    %667 = vmatpush1.bf16.msra.mxu0 %v184
    %668 = vmatprep.subr.bf16.mxu0 0
    %669 = vmatpush2.bf16.msra.mxu0 0
    %670 = vmatprep.subr.bf16.mxu0 0
    %671 = vmatpush2.bf16.msra.mxu0 0
    %672 = vmatprep.subr.bf16.mxu0 0
    %673 = vmatpush2.bf16.msra.mxu0 0
    %674 = vmatprep.subr.bf16.mxu0 0
    %675 = vmatpush2.bf16.msra.mxu0 0
    %676 = vmatprep.subr.bf16.mxu0 0
    %677 = vmatpush2.bf16.msra.mxu0 0
    %678 = vmatprep.subr.bf16.mxu0 0
    %679 = vmatpush2.bf16.msra.mxu0 0
    %680 = vmatprep.subr.bf16.mxu0 0
    %681 = vmatpush2.bf16.msra.mxu0 0
    %682 = vmatprep.subr.bf16.mxu0 0
    %683 = vmatpush2.bf16.msra.mxu0 0
    %684 = vmatprep.mubr.bf16.mxu0 0
    %685 = vmatmul.mubr.bf16.gmra.mxu0 %v610
    %v686 = vpop.f32.mrf.mxu0
    %v687 = vadd.f32 0.0, %v686
    %v688 = vpop.f32.mrf.mxu0
    %v689 = vadd.f32 0.0, %v688
    %v690 = vpop.f32.mrf.mxu0
    %v691 = vpop.f32.mrf.mxu0
    %692 = vdwg.mxu0
    %v693 = vadd.f32 %v606, %v646
    %v694 = vadd.f32 %v607, %v648
    %v695 = vadd.f32 %v608, %v687
    %v696 = vadd.f32 %v609, %v689
    %v697 = vxor.u32 %v693, 2147483648
    %v698 = vmul.f32 %v697, 1.442695
    %v699 = vpow.pop %v698
    %v700 = vadd.f32 %v699, 1.0
    %v701 = vrcp.pop %v700
    %v702 = vmul.f32 1.0, %v701
    %v703 = vxor.u32 %v694, 2147483648
    %v704 = vmul.f32 %v703, 1.442695
    %v705 = vpow.pop %v704
    %v706 = vadd.f32 %v705, 1.0
    %v707 = vrcp.pop %v706
    %v708 = vmul.f32 1.0, %v707
    %v709 = vtanh.pop %v695
    %v710 = vxor.u32 %v696, 2147483648
    %v711 = vmul.f32 %v710, 1.442695
    %v712 = vpow.pop %v711
    %v713 = vadd.f32 %v712, 1.0
    %v714 = vrcp.pop %v713
    %v715 = vmul.f32 1.0, %v714
    %v716 = vmul.f32 %v708, %v604
    %v717 = vmul.f32 %v702, %v709
    %v718 = vadd.f32 %v716, %v717
    %v719 = vtanh.pop %v718
    %v720 = vmul.f32 %v715, %v719
    %721 = vst [vmem:[#allocation2] sm:$0xff] %v720
    %722 = vst [vmem:[#allocation3] sm:$0xff] %v718
    %s723 = scalar_lea.vmem [#allocation9], 24
    %724 = vst [vmem:[%s723] sm:$0xff] %v720
    %v725 = vld [vmem:[#allocation2] sm:$0xff]
    %v726 = vld [vmem:[#allocation3] sm:$0xff]
    %s727 = scalar_lea.vmem [#allocation4], 128
    %v728 = vld [vmem:[%s727] sm:$0xff]
    %v729 = vld [vmem:[%s727 + $0x8] sm:$0xff]
    %v730 = vld [vmem:[%s727 + $0x10] sm:$0xff]
    %v731 = vld [vmem:[%s727 + $0x18] sm:$0xff]
    %v732 = vpack.c.bf16 %v725, %v725
    %733 = vmatprep.subr.bf16.mxu0 %v211
    %734 = vmatpush1.bf16.msra.mxu0 %v210
    %735 = vmatprep.subr.bf16.mxu0 %v207
    %736 = vmatpush1.bf16.msra.mxu0 %v206
    %737 = vmatprep.subr.bf16.mxu0 %v203
    %738 = vmatpush1.bf16.msra.mxu0 %v202
    %739 = vmatprep.subr.bf16.mxu0 %v199
    %740 = vmatpush1.bf16.msra.mxu0 %v198
    %741 = vmatprep.subr.bf16.mxu0 %v195
    %742 = vmatpush1.bf16.msra.mxu0 %v194
    %743 = vmatprep.subr.bf16.mxu0 %v191
    %744 = vmatpush1.bf16.msra.mxu0 %v190
    %745 = vmatprep.subr.bf16.mxu0 %v187
    %746 = vmatpush1.bf16.msra.mxu0 %v186
    %747 = vmatprep.subr.bf16.mxu0 %v183
    %748 = vmatpush1.bf16.msra.mxu0 %v182
    %749 = vmatprep.subr.bf16.mxu0 0
    %750 = vmatpush2.bf16.msra.mxu0 0
    %751 = vmatprep.subr.bf16.mxu0 0
    %752 = vmatpush2.bf16.msra.mxu0 0
    %753 = vmatprep.subr.bf16.mxu0 0
    %754 = vmatpush2.bf16.msra.mxu0 0
    %755 = vmatprep.subr.bf16.mxu0 0
    %756 = vmatpush2.bf16.msra.mxu0 0
    %757 = vmatprep.subr.bf16.mxu0 0
    %758 = vmatpush2.bf16.msra.mxu0 0
    %759 = vmatprep.subr.bf16.mxu0 0
    %760 = vmatpush2.bf16.msra.mxu0 0
    %761 = vmatprep.subr.bf16.mxu0 0
    %762 = vmatpush2.bf16.msra.mxu0 0
    %763 = vmatprep.subr.bf16.mxu0 0
    %764 = vmatpush2.bf16.msra.mxu0 0
    %765 = vmatprep.mubr.bf16.mxu0 0
    %766 = vmatmul.mubr.bf16.gmra.mxu0 %v732
    %v767 = vpop.f32.mrf.mxu0
    %v768 = vadd.f32 0.0, %v767
    %v769 = vpop.f32.mrf.mxu0
    %v770 = vadd.f32 0.0, %v769
    %v771 = vpop.f32.mrf.mxu0
    %v772 = vpop.f32.mrf.mxu0
    %773 = vdwg.mxu0
    %774 = vmatprep.subr.bf16.mxu0 %v213
    %775 = vmatpush1.bf16.msra.mxu0 %v212
    %776 = vmatprep.subr.bf16.mxu0 %v209
    %777 = vmatpush1.bf16.msra.mxu0 %v208
    %778 = vmatprep.subr.bf16.mxu0 %v205
    %779 = vmatpush1.bf16.msra.mxu0 %v204
    %780 = vmatprep.subr.bf16.mxu0 %v201
    %781 = vmatpush1.bf16.msra.mxu0 %v200
    %782 = vmatprep.subr.bf16.mxu0 %v197
    %783 = vmatpush1.bf16.msra.mxu0 %v196
    %784 = vmatprep.subr.bf16.mxu0 %v193
    %785 = vmatpush1.bf16.msra.mxu0 %v192
    %786 = vmatprep.subr.bf16.mxu0 %v189
    %787 = vmatpush1.bf16.msra.mxu0 %v188
    %788 = vmatprep.subr.bf16.mxu0 %v185
    %789 = vmatpush1.bf16.msra.mxu0 %v184
    %790 = vmatprep.subr.bf16.mxu0 0
    %791 = vmatpush2.bf16.msra.mxu0 0
    %792 = vmatprep.subr.bf16.mxu0 0
    %793 = vmatpush2.bf16.msra.mxu0 0
    %794 = vmatprep.subr.bf16.mxu0 0
    %795 = vmatpush2.bf16.msra.mxu0 0
    %796 = vmatprep.subr.bf16.mxu0 0
    %797 = vmatpush2.bf16.msra.mxu0 0
    %798 = vmatprep.subr.bf16.mxu0 0
    %799 = vmatpush2.bf16.msra.mxu0 0
    %800 = vmatprep.subr.bf16.mxu0 0
    %801 = vmatpush2.bf16.msra.mxu0 0
    %802 = vmatprep.subr.bf16.mxu0 0
    %803 = vmatpush2.bf16.msra.mxu0 0
    %804 = vmatprep.subr.bf16.mxu0 0
    %805 = vmatpush2.bf16.msra.mxu0 0
    %806 = vmatprep.mubr.bf16.mxu0 0
    %807 = vmatmul.mubr.bf16.gmra.mxu0 %v732
    %v808 = vpop.f32.mrf.mxu0
    %v809 = vadd.f32 0.0, %v808
    %v810 = vpop.f32.mrf.mxu0
    %v811 = vadd.f32 0.0, %v810
    %v812 = vpop.f32.mrf.mxu0
    %v813 = vpop.f32.mrf.mxu0
    %814 = vdwg.mxu0
    %v815 = vadd.f32 %v728, %v768
    %v816 = vadd.f32 %v729, %v770
    %v817 = vadd.f32 %v730, %v809
    %v818 = vadd.f32 %v731, %v811
    %v819 = vxor.u32 %v815, 2147483648
    %v820 = vmul.f32 %v819, 1.442695
    %v821 = vpow.pop %v820
    %v822 = vadd.f32 %v821, 1.0
    %v823 = vrcp.pop %v822
    %v824 = vmul.f32 1.0, %v823
    %v825 = vxor.u32 %v816, 2147483648
    %v826 = vmul.f32 %v825, 1.442695
    %v827 = vpow.pop %v826
    %v828 = vadd.f32 %v827, 1.0
    %v829 = vrcp.pop %v828
    %v830 = vmul.f32 1.0, %v829
    %v831 = vtanh.pop %v817
    %v832 = vxor.u32 %v818, 2147483648
    %v833 = vmul.f32 %v832, 1.442695
    %v834 = vpow.pop %v833
    %v835 = vadd.f32 %v834, 1.0
    %v836 = vrcp.pop %v835
    %v837 = vmul.f32 1.0, %v836
    %v838 = vmul.f32 %v830, %v726
    %v839 = vmul.f32 %v824, %v831
    %v840 = vadd.f32 %v838, %v839
    %v841 = vtanh.pop %v840
    %v842 = vmul.f32 %v837, %v841
    %843 = vst [vmem:[#allocation2] sm:$0xff] %v842
    %844 = vst [vmem:[#allocation3] sm:$0xff] %v840
    %s845 = scalar_lea.vmem [#allocation9], 32
    %846 = vst [vmem:[%s845] sm:$0xff] %v842
    %v847 = vld [vmem:[#allocation2] sm:$0xff]
    %v848 = vld [vmem:[#allocation3] sm:$0xff]
    %s849 = scalar_lea.vmem [#allocation4], 160
    %v850 = vld [vmem:[%s849] sm:$0xff]
    %v851 = vld [vmem:[%s849 + $0x8] sm:$0xff]
    %v852 = vld [vmem:[%s849 + $0x10] sm:$0xff]
    %v853 = vld [vmem:[%s849 + $0x18] sm:$0xff]
    %v854 = vpack.c.bf16 %v847, %v847
    %855 = vmatprep.subr.bf16.mxu0 %v211
    %856 = vmatpush1.bf16.msra.mxu0 %v210
    %857 = vmatprep.subr.bf16.mxu0 %v207
    %858 = vmatpush1.bf16.msra.mxu0 %v206
    %859 = vmatprep.subr.bf16.mxu0 %v203
    %860 = vmatpush1.bf16.msra.mxu0 %v202
    %861 = vmatprep.subr.bf16.mxu0 %v199
    %862 = vmatpush1.bf16.msra.mxu0 %v198
    %863 = vmatprep.subr.bf16.mxu0 %v195
    %864 = vmatpush1.bf16.msra.mxu0 %v194
    %865 = vmatprep.subr.bf16.mxu0 %v191
    %866 = vmatpush1.bf16.msra.mxu0 %v190
    %867 = vmatprep.subr.bf16.mxu0 %v187
    %868 = vmatpush1.bf16.msra.mxu0 %v186
    %869 = vmatprep.subr.bf16.mxu0 %v183
    %870 = vmatpush1.bf16.msra.mxu0 %v182
    %871 = vmatprep.subr.bf16.mxu0 0
    %872 = vmatpush2.bf16.msra.mxu0 0
    %873 = vmatprep.subr.bf16.mxu0 0
    %874 = vmatpush2.bf16.msra.mxu0 0
    %875 = vmatprep.subr.bf16.mxu0 0
    %876 = vmatpush2.bf16.msra.mxu0 0
    %877 = vmatprep.subr.bf16.mxu0 0
    %878 = vmatpush2.bf16.msra.mxu0 0
    %879 = vmatprep.subr.bf16.mxu0 0
    %880 = vmatpush2.bf16.msra.mxu0 0
    %881 = vmatprep.subr.bf16.mxu0 0
    %882 = vmatpush2.bf16.msra.mxu0 0
    %883 = vmatprep.subr.bf16.mxu0 0
    %884 = vmatpush2.bf16.msra.mxu0 0
    %885 = vmatprep.subr.bf16.mxu0 0
    %886 = vmatpush2.bf16.msra.mxu0 0
    %887 = vmatprep.mubr.bf16.mxu0 0
    %888 = vmatmul.mubr.bf16.gmra.mxu0 %v854
    %v889 = vpop.f32.mrf.mxu0
    %v890 = vadd.f32 0.0, %v889
    %v891 = vpop.f32.mrf.mxu0
    %v892 = vadd.f32 0.0, %v891
    %v893 = vpop.f32.mrf.mxu0
    %v894 = vpop.f32.mrf.mxu0
    %895 = vdwg.mxu0
    %896 = vmatprep.subr.bf16.mxu0 %v213
    %897 = vmatpush1.bf16.msra.mxu0 %v212
    %898 = vmatprep.subr.bf16.mxu0 %v209
    %899 = vmatpush1.bf16.msra.mxu0 %v208
    %900 = vmatprep.subr.bf16.mxu0 %v205
    %901 = vmatpush1.bf16.msra.mxu0 %v204
    %902 = vmatprep.subr.bf16.mxu0 %v201
    %903 = vmatpush1.bf16.msra.mxu0 %v200
    %904 = vmatprep.subr.bf16.mxu0 %v197
    %905 = vmatpush1.bf16.msra.mxu0 %v196
    %906 = vmatprep.subr.bf16.mxu0 %v193
    %907 = vmatpush1.bf16.msra.mxu0 %v192
    %908 = vmatprep.subr.bf16.mxu0 %v189
    %909 = vmatpush1.bf16.msra.mxu0 %v188
    %910 = vmatprep.subr.bf16.mxu0 %v185
    %911 = vmatpush1.bf16.msra.mxu0 %v184
    %912 = vmatprep.subr.bf16.mxu0 0
    %913 = vmatpush2.bf16.msra.mxu0 0
    %914 = vmatprep.subr.bf16.mxu0 0
    %915 = vmatpush2.bf16.msra.mxu0 0
    %916 = vmatprep.subr.bf16.mxu0 0
    %917 = vmatpush2.bf16.msra.mxu0 0
    %918 = vmatprep.subr.bf16.mxu0 0
    %919 = vmatpush2.bf16.msra.mxu0 0
    %920 = vmatprep.subr.bf16.mxu0 0
    %921 = vmatpush2.bf16.msra.mxu0 0
    %922 = vmatprep.subr.bf16.mxu0 0
    %923 = vmatpush2.bf16.msra.mxu0 0
    %924 = vmatprep.subr.bf16.mxu0 0
    %925 = vmatpush2.bf16.msra.mxu0 0
    %926 = vmatprep.subr.bf16.mxu0 0
    %927 = vmatpush2.bf16.msra.mxu0 0
    %928 = vmatprep.mubr.bf16.mxu0 0
    %929 = vmatmul.mubr.bf16.gmra.mxu0 %v854
    %v930 = vpop.f32.mrf.mxu0
    %v931 = vadd.f32 0.0, %v930
    %v932 = vpop.f32.mrf.mxu0
    %v933 = vadd.f32 0.0, %v932
    %v934 = vpop.f32.mrf.mxu0
    %v935 = vpop.f32.mrf.mxu0
    %936 = vdwg.mxu0
    %v937 = vadd.f32 %v850, %v890
    %v938 = vadd.f32 %v851, %v892
    %v939 = vadd.f32 %v852, %v931
    %v940 = vadd.f32 %v853, %v933
    %v941 = vxor.u32 %v937, 2147483648
    %v942 = vmul.f32 %v941, 1.442695
    %v943 = vpow.pop %v942
    %v944 = vadd.f32 %v943, 1.0
    %v945 = vrcp.pop %v944
    %v946 = vmul.f32 1.0, %v945
    %v947 = vxor.u32 %v938, 2147483648
    %v948 = vmul.f32 %v947, 1.442695
    %v949 = vpow.pop %v948
    %v950 = vadd.f32 %v949, 1.0
    %v951 = vrcp.pop %v950
    %v952 = vmul.f32 1.0, %v951
    %v953 = vtanh.pop %v939
    %v954 = vxor.u32 %v940, 2147483648
    %v955 = vmul.f32 %v954, 1.442695
    %v956 = vpow.pop %v955
    %v957 = vadd.f32 %v956, 1.0
    %v958 = vrcp.pop %v957
    %v959 = vmul.f32 1.0, %v958
    %v960 = vmul.f32 %v952, %v848
    %v961 = vmul.f32 %v946, %v953
    %v962 = vadd.f32 %v960, %v961
    %v963 = vtanh.pop %v962
    %v964 = vmul.f32 %v959, %v963
    %965 = vst [vmem:[#allocation2] sm:$0xff] %v964
    %966 = vst [vmem:[#allocation3] sm:$0xff] %v962
    %s967 = scalar_lea.vmem [#allocation9], 40
    %968 = vst [vmem:[%s967] sm:$0xff] %v964
    %v969 = vld [vmem:[#allocation2] sm:$0xff]
    %v970 = vld [vmem:[#allocation3] sm:$0xff]
    %s971 = scalar_lea.vmem [#allocation4], 192
    %v972 = vld [vmem:[%s971] sm:$0xff]
    %v973 = vld [vmem:[%s971 + $0x8] sm:$0xff]
    %v974 = vld [vmem:[%s971 + $0x10] sm:$0xff]
    %v975 = vld [vmem:[%s971 + $0x18] sm:$0xff]
    %v976 = vpack.c.bf16 %v969, %v969
    %977 = vmatprep.subr.bf16.mxu0 %v211
    %978 = vmatpush1.bf16.msra.mxu0 %v210
    %979 = vmatprep.subr.bf16.mxu0 %v207
    %980 = vmatpush1.bf16.msra.mxu0 %v206
    %981 = vmatprep.subr.bf16.mxu0 %v203
    %982 = vmatpush1.bf16.msra.mxu0 %v202
    %983 = vmatprep.subr.bf16.mxu0 %v199
    %984 = vmatpush1.bf16.msra.mxu0 %v198
    %985 = vmatprep.subr.bf16.mxu0 %v195
    %986 = vmatpush1.bf16.msra.mxu0 %v194
    %987 = vmatprep.subr.bf16.mxu0 %v191
    %988 = vmatpush1.bf16.msra.mxu0 %v190
    %989 = vmatprep.subr.bf16.mxu0 %v187
    %990 = vmatpush1.bf16.msra.mxu0 %v186
    %991 = vmatprep.subr.bf16.mxu0 %v183
    %992 = vmatpush1.bf16.msra.mxu0 %v182
    %993 = vmatprep.subr.bf16.mxu0 0
    %994 = vmatpush2.bf16.msra.mxu0 0
    %995 = vmatprep.subr.bf16.mxu0 0
    %996 = vmatpush2.bf16.msra.mxu0 0
    %997 = vmatprep.subr.bf16.mxu0 0
    %998 = vmatpush2.bf16.msra.mxu0 0
    %999 = vmatprep.subr.bf16.mxu0 0
    %1000 = vmatpush2.bf16.msra.mxu0 0
    %1001 = vmatprep.subr.bf16.mxu0 0
    %1002 = vmatpush2.bf16.msra.mxu0 0
    %1003 = vmatprep.subr.bf16.mxu0 0
    %1004 = vmatpush2.bf16.msra.mxu0 0
    %1005 = vmatprep.subr.bf16.mxu0 0
    %1006 = vmatpush2.bf16.msra.mxu0 0
    %1007 = vmatprep.subr.bf16.mxu0 0
    %1008 = vmatpush2.bf16.msra.mxu0 0
    %1009 = vmatprep.mubr.bf16.mxu0 0
    %1010 = vmatmul.mubr.bf16.gmra.mxu0 %v976
    %v1011 = vpop.f32.mrf.mxu0
    %v1012 = vadd.f32 0.0, %v1011
    %v1013 = vpop.f32.mrf.mxu0
    %v1014 = vadd.f32 0.0, %v1013
    %v1015 = vpop.f32.mrf.mxu0
    %v1016 = vpop.f32.mrf.mxu0
    %1017 = vdwg.mxu0
    %1018 = vmatprep.subr.bf16.mxu0 %v213
    %1019 = vmatpush1.bf16.msra.mxu0 %v212
    %1020 = vmatprep.subr.bf16.mxu0 %v209
    %1021 = vmatpush1.bf16.msra.mxu0 %v208
    %1022 = vmatprep.subr.bf16.mxu0 %v205
    %1023 = vmatpush1.bf16.msra.mxu0 %v204
    %1024 = vmatprep.subr.bf16.mxu0 %v201
    %1025 = vmatpush1.bf16.msra.mxu0 %v200
    %1026 = vmatprep.subr.bf16.mxu0 %v197
    %1027 = vmatpush1.bf16.msra.mxu0 %v196
    %1028 = vmatprep.subr.bf16.mxu0 %v193
    %1029 = vmatpush1.bf16.msra.mxu0 %v192
    %1030 = vmatprep.subr.bf16.mxu0 %v189
    %1031 = vmatpush1.bf16.msra.mxu0 %v188
    %1032 = vmatprep.subr.bf16.mxu0 %v185
    %1033 = vmatpush1.bf16.msra.mxu0 %v184
    %1034 = vmatprep.subr.bf16.mxu0 0
    %1035 = vmatpush2.bf16.msra.mxu0 0
    %1036 = vmatprep.subr.bf16.mxu0 0
    %1037 = vmatpush2.bf16.msra.mxu0 0
    %1038 = vmatprep.subr.bf16.mxu0 0
    %1039 = vmatpush2.bf16.msra.mxu0 0
    %1040 = vmatprep.subr.bf16.mxu0 0
    %1041 = vmatpush2.bf16.msra.mxu0 0
    %1042 = vmatprep.subr.bf16.mxu0 0
    %1043 = vmatpush2.bf16.msra.mxu0 0
    %1044 = vmatprep.subr.bf16.mxu0 0
    %1045 = vmatpush2.bf16.msra.mxu0 0
    %1046 = vmatprep.subr.bf16.mxu0 0
    %1047 = vmatpush2.bf16.msra.mxu0 0
    %1048 = vmatprep.subr.bf16.mxu0 0
    %1049 = vmatpush2.bf16.msra.mxu0 0
    %1050 = vmatprep.mubr.bf16.mxu0 0
    %1051 = vmatmul.mubr.bf16.gmra.mxu0 %v976
    %v1052 = vpop.f32.mrf.mxu0
    %v1053 = vadd.f32 0.0, %v1052
    %v1054 = vpop.f32.mrf.mxu0
    %v1055 = vadd.f32 0.0, %v1054
    %v1056 = vpop.f32.mrf.mxu0
    %v1057 = vpop.f32.mrf.mxu0
    %1058 = vdwg.mxu0
    %v1059 = vadd.f32 %v972, %v1012
    %v1060 = vadd.f32 %v973, %v1014
    %v1061 = vadd.f32 %v974, %v1053
    %v1062 = vadd.f32 %v975, %v1055
    %v1063 = vxor.u32 %v1059, 2147483648
    %v1064 = vmul.f32 %v1063, 1.442695
    %v1065 = vpow.pop %v1064
    %v1066 = vadd.f32 %v1065, 1.0
    %v1067 = vrcp.pop %v1066
    %v1068 = vmul.f32 1.0, %v1067
    %v1069 = vxor.u32 %v1060, 2147483648
    %v1070 = vmul.f32 %v1069, 1.442695
    %v1071 = vpow.pop %v1070
    %v1072 = vadd.f32 %v1071, 1.0
    %v1073 = vrcp.pop %v1072
    %v1074 = vmul.f32 1.0, %v1073
    %v1075 = vtanh.pop %v1061
    %v1076 = vxor.u32 %v1062, 2147483648
    %v1077 = vmul.f32 %v1076, 1.442695
    %v1078 = vpow.pop %v1077
    %v1079 = vadd.f32 %v1078, 1.0
    %v1080 = vrcp.pop %v1079
    %v1081 = vmul.f32 1.0, %v1080
    %v1082 = vmul.f32 %v1074, %v970
    %v1083 = vmul.f32 %v1068, %v1075
    %v1084 = vadd.f32 %v1082, %v1083
    %v1085 = vtanh.pop %v1084
    %v1086 = vmul.f32 %v1081, %v1085
    %1087 = vst [vmem:[#allocation2] sm:$0xff] %v1086
    %1088 = vst [vmem:[#allocation3] sm:$0xff] %v1084
    %s1089 = scalar_lea.vmem [#allocation9], 48
    %1090 = vst [vmem:[%s1089] sm:$0xff] %v1086
    %v1091 = vld [vmem:[#allocation2] sm:$0xff]
    %v1092 = vld [vmem:[#allocation3] sm:$0xff]
    %s1093 = scalar_lea.vmem [#allocation4], 224
    %v1094 = vld [vmem:[%s1093] sm:$0xff]
    %v1095 = vld [vmem:[%s1093 + $0x8] sm:$0xff]
    %v1096 = vld [vmem:[%s1093 + $0x10] sm:$0xff]
    %v1097 = vld [vmem:[%s1093 + $0x18] sm:$0xff]
    %v1098 = vpack.c.bf16 %v1091, %v1091
    %1099 = vmatprep.subr.bf16.mxu0 %v211
    %1100 = vmatpush1.bf16.msra.mxu0 %v210
    %1101 = vmatprep.subr.bf16.mxu0 %v207
    %1102 = vmatpush1.bf16.msra.mxu0 %v206
    %1103 = vmatprep.subr.bf16.mxu0 %v203
    %1104 = vmatpush1.bf16.msra.mxu0 %v202
    %1105 = vmatprep.subr.bf16.mxu0 %v199
    %1106 = vmatpush1.bf16.msra.mxu0 %v198
    %1107 = vmatprep.subr.bf16.mxu0 %v195
    %1108 = vmatpush1.bf16.msra.mxu0 %v194
    %1109 = vmatprep.subr.bf16.mxu0 %v191
    %1110 = vmatpush1.bf16.msra.mxu0 %v190
    %1111 = vmatprep.subr.bf16.mxu0 %v187
    %1112 = vmatpush1.bf16.msra.mxu0 %v186
    %1113 = vmatprep.subr.bf16.mxu0 %v183
    %1114 = vmatpush1.bf16.msra.mxu0 %v182
    %1115 = vmatprep.subr.bf16.mxu0 0
    %1116 = vmatpush2.bf16.msra.mxu0 0
    %1117 = vmatprep.subr.bf16.mxu0 0
    %1118 = vmatpush2.bf16.msra.mxu0 0
    %1119 = vmatprep.subr.bf16.mxu0 0
    %1120 = vmatpush2.bf16.msra.mxu0 0
    %1121 = vmatprep.subr.bf16.mxu0 0
    %1122 = vmatpush2.bf16.msra.mxu0 0
    %1123 = vmatprep.subr.bf16.mxu0 0
    %1124 = vmatpush2.bf16.msra.mxu0 0
    %1125 = vmatprep.subr.bf16.mxu0 0
    %1126 = vmatpush2.bf16.msra.mxu0 0
    %1127 = vmatprep.subr.bf16.mxu0 0
    %1128 = vmatpush2.bf16.msra.mxu0 0
    %1129 = vmatprep.subr.bf16.mxu0 0
    %1130 = vmatpush2.bf16.msra.mxu0 0
    %1131 = vmatprep.mubr.bf16.mxu0 0
    %1132 = vmatmul.mubr.bf16.gmra.mxu0 %v1098
    %v1133 = vpop.f32.mrf.mxu0
    %v1134 = vadd.f32 0.0, %v1133
    %v1135 = vpop.f32.mrf.mxu0
    %v1136 = vadd.f32 0.0, %v1135
    %v1137 = vpop.f32.mrf.mxu0
    %v1138 = vpop.f32.mrf.mxu0
    %1139 = vdwg.mxu0
    %1140 = vmatprep.subr.bf16.mxu0 %v213
    %1141 = vmatpush1.bf16.msra.mxu0 %v212
    %1142 = vmatprep.subr.bf16.mxu0 %v209
    %1143 = vmatpush1.bf16.msra.mxu0 %v208
    %1144 = vmatprep.subr.bf16.mxu0 %v205
    %1145 = vmatpush1.bf16.msra.mxu0 %v204
    %1146 = vmatprep.subr.bf16.mxu0 %v201
    %1147 = vmatpush1.bf16.msra.mxu0 %v200
    %1148 = vmatprep.subr.bf16.mxu0 %v197
    %1149 = vmatpush1.bf16.msra.mxu0 %v196
    %1150 = vmatprep.subr.bf16.mxu0 %v193
    %1151 = vmatpush1.bf16.msra.mxu0 %v192
    %1152 = vmatprep.subr.bf16.mxu0 %v189
    %1153 = vmatpush1.bf16.msra.mxu0 %v188
    %1154 = vmatprep.subr.bf16.mxu0 %v185
    %1155 = vmatpush1.bf16.msra.mxu0 %v184
    %1156 = vmatprep.subr.bf16.mxu0 0
    %1157 = vmatpush2.bf16.msra.mxu0 0
    %1158 = vmatprep.subr.bf16.mxu0 0
    %1159 = vmatpush2.bf16.msra.mxu0 0
    %1160 = vmatprep.subr.bf16.mxu0 0
    %1161 = vmatpush2.bf16.msra.mxu0 0
    %1162 = vmatprep.subr.bf16.mxu0 0
    %1163 = vmatpush2.bf16.msra.mxu0 0
    %1164 = vmatprep.subr.bf16.mxu0 0
    %1165 = vmatpush2.bf16.msra.mxu0 0
    %1166 = vmatprep.subr.bf16.mxu0 0
    %1167 = vmatpush2.bf16.msra.mxu0 0
    %1168 = vmatprep.subr.bf16.mxu0 0
    %1169 = vmatpush2.bf16.msra.mxu0 0
    %1170 = vmatprep.subr.bf16.mxu0 0
    %1171 = vmatpush2.bf16.msra.mxu0 0
    %1172 = vmatprep.mubr.bf16.mxu0 0
    %1173 = vmatmul.mubr.bf16.gmra.mxu0 %v1098
    %v1174 = vpop.f32.mrf.mxu0
    %v1175 = vadd.f32 0.0, %v1174
    %v1176 = vpop.f32.mrf.mxu0
    %v1177 = vadd.f32 0.0, %v1176
    %v1178 = vpop.f32.mrf.mxu0
    %v1179 = vpop.f32.mrf.mxu0
    %1180 = vdwg.mxu0
    %v1181 = vadd.f32 %v1094, %v1134
    %v1182 = vadd.f32 %v1095, %v1136
    %v1183 = vadd.f32 %v1096, %v1175
    %v1184 = vadd.f32 %v1097, %v1177
    %v1185 = vxor.u32 %v1181, 2147483648
    %v1186 = vmul.f32 %v1185, 1.442695
    %v1187 = vpow.pop %v1186
    %v1188 = vadd.f32 %v1187, 1.0
    %v1189 = vrcp.pop %v1188
    %v1190 = vmul.f32 1.0, %v1189
    %v1191 = vxor.u32 %v1182, 2147483648
    %v1192 = vmul.f32 %v1191, 1.442695
    %v1193 = vpow.pop %v1192
    %v1194 = vadd.f32 %v1193, 1.0
    %v1195 = vrcp.pop %v1194
    %v1196 = vmul.f32 1.0, %v1195
    %v1197 = vtanh.pop %v1183
    %v1198 = vxor.u32 %v1184, 2147483648
    %v1199 = vmul.f32 %v1198, 1.442695
    %v1200 = vpow.pop %v1199
    %v1201 = vadd.f32 %v1200, 1.0
    %v1202 = vrcp.pop %v1201
    %v1203 = vmul.f32 1.0, %v1202
    %v1204 = vmul.f32 %v1196, %v1092
    %v1205 = vmul.f32 %v1190, %v1197
    %v1206 = vadd.f32 %v1204, %v1205
    %v1207 = vtanh.pop %v1206
    %v1208 = vmul.f32 %v1203, %v1207
    %1209 = vst [vmem:[#allocation2] sm:$0xff] %v1208
    %1210 = vst [vmem:[#allocation3] sm:$0xff] %v1206
    %s1211 = scalar_lea.vmem [#allocation9], 56
    %1212 = vst [vmem:[%s1211] sm:$0xff] %v1208
    // Predicated region
    $region22: #{tpu_custom_call.1} parent=1 // pred_check
      _
    $region23: #{tpu_custom_call.1} parent=1 // pred_check_branch
      %1214 = sbr.rel (0) target = $region25
    $region24: #{tpu_custom_call.1} parent=1 // pred_region
      %s1216 = ssub.s32 1024, 1024
      %1217 = vsyncadd [#allocation6], %s1216
      %s1218 = sshll.u32 [#allocation9], 4
      %s1219 = int_to_ptr.vmem [resolvable:$true] %s1218
      %1224 = dma.vmem_to_hbm [thread:$0]  %s1219, 1024, %s2, [#allocation6], 128, 128, 8
    $region25: #{tpu_custom_call.1} parent=1 // pred_fallthru
      _
    // Predicated region
    $region26: #{tpu_custom_call.1} parent=1 // pred_check
      _
    $region27: #{tpu_custom_call.1} parent=1 // pred_check_branch
      %1226 = sbr.rel (0) target = $region29
    $region28: #{tpu_custom_call.1} parent=1 // pred_region
      %1227 = dma.done [#allocation6], 1024
    $region29: #{tpu_custom_call.1} parent=1 // pred_fallthru
      _
    %1228 = vsyncpa [#allocation5], 1
    %1229 = vsyncpa [#allocation8], 1
    %1230 = vsyncpa [#allocation6], 1

</llo_original>
